<compile_context>
chip_gen: v7x
topology: tpu7x:2x2x1
jax: 0.10.0
libtpu: 0.0.40
codegen_flags: <defaults>
</compile_context>

<pallas_src>
import jax
import jax.numpy as jnp
from jax import lax
from jax.experimental import pallas as pl
from jax.experimental.pallas import tpu as pltpu


def feature_based_kernel(ids_ref,     # VMEM (TB*S, 1) int32   token ids for this batch tile
                         emb_ref,     # VMEM (V, H)    bf16    embedding table (resident)
                         wb_ref,      # VMEM (H, H)    bf16    frozen backbone weight
                         bb_ref,      # VMEM (1, H)    f32     frozen backbone bias
                         wc_ref,      # VMEM (H, CP)   f32     classifier weight (padded)
                         bc_ref,      # VMEM (1, CP)   f32     classifier bias (pad cols = -1e30)
                         lab_ref,     # VMEM (TB, 1)   int32   integer labels
                         out_ref,     # VMEM (TB, CP)  f32     logits slab; last col = per-ex NLL
                         feat_ref):   # VMEM (TB, H)   f32     mean-pooled features
    TBS = ids_ref.shape[0]
    V, H = emb_ref.shape
    TB = lab_ref.shape[0]
    S = TBS // TB
    CP = out_ref.shape[1]

    # --- fused embedding gather as a one-hot bf16 MXU matmul (no per-row DMAs) -------
    ids = ids_ref[...]                                              # (TBS, 1) int32
    vocab_iota = lax.broadcasted_iota(jnp.int32, (TBS, V), 1)
    one_hot = (vocab_iota == ids).astype(jnp.bfloat16)              # (TBS, V)
    emb = jnp.dot(one_hot, emb_ref[...],
                  preferred_element_type=jnp.float32)               # (TBS, H) f32 (exact rows)

    # --- frozen backbone: dense (TB*S, H) @ (H, H) bf16 matmul, f32 bias + tanh ------
    h = jnp.dot(emb.astype(jnp.bfloat16), wb_ref[...],
                preferred_element_type=jnp.float32)
    h = jnp.tanh(h + bb_ref[...])                                   # (TBS, H) f32

    # --- features = last_hidden_state.mean(dim=1) -------------------------------------
    feats = jnp.mean(h.reshape(TB, S, H), axis=1)                   # (TB, H) f32
    feat_ref[...] = feats

    # --- trainable classifier head in f32 (lane-dense, padded to CP columns) ---------
    logits = jnp.dot(feats, wc_ref[...],
                     preferred_element_type=jnp.float32) + bc_ref[...]   # (TB, CP)
    # padded columns carry bias -1e30 -> they never win the max and exp() underflows to 0

    # --- CrossEntropyLoss from integer labels (no one-hot input DMA) -----------------
    m = jnp.max(logits, axis=-1, keepdims=True)
    z = logits - m
    lse = jnp.log(jnp.sum(jnp.exp(z), axis=-1, keepdims=True))
    logp = z - lse                                                   # log-softmax, f32
    cls_iota = lax.broadcasted_iota(jnp.int32, (TB, CP), 1)
    picked = jnp.sum(jnp.where(cls_iota == lab_ref[...], logp, 0.0),
                     axis=-1, keepdims=True)                         # (TB, 1)

    # Lane-dense single store: real logits in columns [:C], per-example NLL in the
    # last column of the slab (sliced apart in the wrapper).
    out_ref[...] = jnp.where(cls_iota == CP - 1, -picked, logits)


def feature_based_forward(input_ids, emb_table, wb, bb, wc, bc, labels, *, tb=32):
    B, S = input_ids.shape
    V, H = emb_table.shape
    C = wc.shape[1]
    assert B % tb == 0, "batch must be divisible by the batch tile"
    nb = B // tb
    CP = max(128, ((C + 127) // 128) * 128)   # lane-dense padded class dimension

    # Wrapper-side prep: column-vector ids for the in-kernel one-hot gather, bf16
    # frozen-backbone operands, f32 lane-dense-padded classifier.
    ids_col = input_ids.reshape(B * S, 1).astype(jnp.int32)
    labels2d = labels.reshape(B, 1).astype(jnp.int32)
    emb_bf = emb_table.astype(jnp.bfloat16)
    wb_bf = wb.astype(jnp.bfloat16)
    bb_f = bb.reshape(1, H).astype(jnp.float32)
    wc_pad = jnp.zeros((H, CP), jnp.float32).at[:, :C].set(wc.astype(jnp.float32))
    bc_pad = jnp.full((1, CP), -1e30, jnp.float32).at[:, :C].set(
        bc.reshape(1, C).astype(jnp.float32))

    grid_spec = pltpu.PrefetchScalarGridSpec(
        num_scalar_prefetch=0,
        grid=(nb,),
        in_specs=[
            pl.BlockSpec((tb * S, 1), lambda i: (i, 0)),   # token ids tile
            pl.BlockSpec((V, H), lambda i: (0, 0)),        # embedding table (VMEM-resident)
            pl.BlockSpec((H, H), lambda i: (0, 0)),        # Wb (VMEM-resident)
            pl.BlockSpec((1, H), lambda i: (0, 0)),        # bb
            pl.BlockSpec((H, CP), lambda i: (0, 0)),       # Wc (padded, f32)
            pl.BlockSpec((1, CP), lambda i: (0, 0)),       # bc (padded, f32)
            pl.BlockSpec((tb, 1), lambda i: (i, 0)),       # labels tile
        ],
        out_specs=(
            pl.BlockSpec((tb, CP), lambda i: (i, 0)),      # logits slab (+ NLL column)
            pl.BlockSpec((tb, H), lambda i: (i, 0)),       # features
        ),
    )

    out_slab, feats = pl.pallas_call(
        feature_based_kernel,
        grid_spec=grid_spec,
        out_shape=(
            jax.ShapeDtypeStruct((B, CP), jnp.float32),
            jax.ShapeDtypeStruct((B, H), jnp.float32),
        ),
        compiler_params=pltpu.CompilerParams(
            dimension_semantics=("parallel",)),
    )(ids_col, emb_bf, wb_bf, bb_f, wc_pad, bc_pad, labels2d)

    logits = out_slab[:, :C]
    loss = jnp.mean(out_slab[:, CP - 1])   # mean NLL == nn.CrossEntropyLoss default
    return {"logits": logits, "features": feats, "loss": loss}


if __name__ == "__main__":
    # Small deterministic shapes: batch=64 (2 batch tiles of 32 -> both v7x cores busy),
    # seq=8, hidden/feature_dim=128, num_classes=16, vocab=64.
    B, S, H, C, V = 64, 8, 128, 16, 64

    key = jax.random.PRNGKey(0)
    k_tab, k_ids, k_wb, k_bb, k_wc, k_bc, k_lab = jax.random.split(key, 7)

    emb_table = jax.random.normal(k_tab, (V, H), jnp.float32) * 0.02
    wb = jax.random.normal(k_wb, (H, H), jnp.float32) * (1.0 / jnp.sqrt(H))
    bb = jax.random.normal(k_bb, (1, H), jnp.float32) * 0.01
    wc = jax.random.normal(k_wc, (H, C), jnp.float32) * (1.0 / jnp.sqrt(H))
    bc = jax.random.normal(k_bc, (1, C), jnp.float32) * 0.01

    input_ids = jax.random.randint(k_ids, (B, S), 0, V)
    labels = jax.random.randint(k_lab, (B,), 0, C)

    out = feature_based_forward(input_ids, emb_table, wb, bb, wc, bc, labels, tb=32)
    jax.block_until_ready(out)

    assert out["logits"].shape == (B, C)
    assert out["features"].shape == (B, H)
    assert out["loss"].shape == ()

    # Pure-JAX reference (same numeric path: bf16 frozen backbone, f32 head / CE).
    emb_ref = emb_table.astype(jnp.bfloat16)[input_ids]                       # (B,S,H)
    h_ref = jnp.tanh(jnp.einsum('bsh,hk->bsk', emb_ref, wb.astype(jnp.bfloat16),
                                preferred_element_type=jnp.float32) + bb)
    feats_ref = jnp.mean(h_ref, axis=1)
    logits_ref = jnp.dot(feats_ref, wc, preferred_element_type=jnp.float32) + bc
    logp_ref = jax.nn.log_softmax(logits_ref, axis=-1)
    loss_ref = -jnp.mean(logp_ref[jnp.arange(B), labels])

    assert jnp.all(jnp.isfinite(out["logits"]))
    assert jnp.allclose(out["features"], feats_ref, atol=1e-2, rtol=1e-2)
    assert jnp.allclose(out["logits"], logits_ref, atol=1e-2, rtol=1e-2)
    assert jnp.allclose(out["loss"], loss_ref, atol=1e-2, rtol=1e-2)

    print("KERNEL_OK")
</pallas_src>

<mosaic_0001>
module attributes {stable_mosaic.version = 11 : i64} {
  func.func @feature_based_kernel(%arg0: i32, %arg1: memref<256x1xi32, #tpu.memory_space<vmem>>, %arg2: memref<64x128xbf16, #tpu.memory_space<vmem>>, %arg3: memref<128x128xbf16, #tpu.memory_space<vmem>>, %arg4: memref<1x128xf32, #tpu.memory_space<vmem>>, %arg5: memref<128x128xf32, #tpu.memory_space<vmem>>, %arg6: memref<1x128xf32, #tpu.memory_space<vmem>>, %arg7: memref<32x1xi32, #tpu.memory_space<vmem>>, %arg8: memref<32x128xf32, #tpu.memory_space<vmem>>, %arg9: memref<32x128xf32, #tpu.memory_space<vmem>>) attributes {dimension_semantics = [#tpu.dimension_semantics<parallel>], iteration_bounds = array<i64: 2>, scalar_prefetch = 0 : i64, scratch_operands = 0 : i64, tpu.core_type = #tpu.core_type<tc>, window_params = [{transform_indices = @transform_0, window_bounds = array<i64: 256, 1>}, {pipeline_mode = #tpu.pipeline_mode<synchronous>, transform_indices = @transform_1, window_bounds = array<i64: 64, 128>}, {pipeline_mode = #tpu.pipeline_mode<synchronous>, transform_indices = @transform_2, window_bounds = array<i64: 128, 128>}, {pipeline_mode = #tpu.pipeline_mode<synchronous>, transform_indices = @transform_3, window_bounds = array<i64: 1, 128>}, {pipeline_mode = #tpu.pipeline_mode<synchronous>, transform_indices = @transform_4, window_bounds = array<i64: 128, 128>}, {pipeline_mode = #tpu.pipeline_mode<synchronous>, transform_indices = @transform_5, window_bounds = array<i64: 1, 128>}, {transform_indices = @transform_6, window_bounds = array<i64: 32, 1>}, {transform_indices = @transform_7, window_bounds = array<i64: 32, 128>}, {transform_indices = @transform_8, window_bounds = array<i64: 32, 128>}]} {
    %c0 = arith.constant 0 : index
    %c0_0 = arith.constant 0 : index
    %0 = vector.load %arg1[%c0, %c0_0] : memref<256x1xi32, #tpu.memory_space<vmem>>, vector<256x1xi32>
    %1 = tpu.iota {dimensions = array<i32: 1>} : vector<256x64xi32>
    %2 = vector.broadcast %0 : vector<256x1xi32> to vector<256x64xi32>
    %3 = arith.cmpi eq, %1, %2 : vector<256x64xi32>
    %4 = arith.extui %3 : vector<256x64xi1> to vector<256x64xi32>
    %5 = arith.sitofp %4 : vector<256x64xi32> to vector<256x64xf32>
    %6 = arith.truncf %5 : vector<256x64xf32> to vector<256x64xbf16>
    %c0_1 = arith.constant 0 : index
    %c0_2 = arith.constant 0 : index
    %7 = vector.load %arg2[%c0_1, %c0_2] : memref<64x128xbf16, #tpu.memory_space<vmem>>, vector<64x128xbf16>
    %cst = arith.constant dense<0.000000e+00> : vector<256x128xf32>
    %8 = tpu.matmul %6, %7, %cst {dimension_numbers = #tpu.dot_dimension_numbers<[1], [0], [0], [1], [0, 0, 1, 1], [], []>} : vector<256x64xbf16>, vector<64x128xbf16>, vector<256x128xf32> -> vector<256x128xf32>
    %9 = arith.truncf %8 : vector<256x128xf32> to vector<256x128xbf16>
    %c0_3 = arith.constant 0 : index
    %c0_4 = arith.constant 0 : index
    %10 = vector.load %arg3[%c0_3, %c0_4] : memref<128x128xbf16, #tpu.memory_space<vmem>>, vector<128x128xbf16>
    %cst_5 = arith.constant dense<0.000000e+00> : vector<256x128xf32>
    %11 = tpu.matmul %9, %10, %cst_5 {dimension_numbers = #tpu.dot_dimension_numbers<[1], [0], [0], [1], [0, 0, 1, 1], [], []>} : vector<256x128xbf16>, vector<128x128xbf16>, vector<256x128xf32> -> vector<256x128xf32>
    %c0_6 = arith.constant 0 : index
    %c0_7 = arith.constant 0 : index
    %12 = vector.load %arg4[%c0_6, %c0_7] : memref<1x128xf32, #tpu.memory_space<vmem>>, vector<1x128xf32>
    %13 = vector.broadcast %12 : vector<1x128xf32> to vector<256x128xf32>
    %14 = arith.addf %11, %13 : vector<256x128xf32>
    %15 = math.tanh %14 : vector<256x128xf32>
    %16 = vector.shape_cast %15 : vector<256x128xf32> to vector<32x8x128xf32>
    %cst_8 = arith.constant dense<0.000000e+00> : vector<32x128xf32>
    %17 = vector.multi_reduction <add>, %16, %cst_8 [1] : vector<32x8x128xf32> to vector<32x128xf32>
    %cst_9 = arith.constant 8.000000e+00 : f32
    %18 = vector.broadcast %cst_9 : f32 to vector<32x128xf32>
    %19 = arith.divf %17, %18 : vector<32x128xf32>
    %c0_10 = arith.constant 0 : index
    %c0_11 = arith.constant 0 : index
    %20 = vector.load %arg9[%c0_10, %c0_11] : memref<32x128xf32, #tpu.memory_space<vmem>>, vector<32x128xf32>
    tpu.vector_store %arg9[%c0_10, %c0_11], %19 {strides = array<i32>} : memref<32x128xf32, #tpu.memory_space<vmem>>, vector<32x128xf32>,
    %c0_12 = arith.constant 0 : index
    %c0_13 = arith.constant 0 : index
    %21 = vector.load %arg5[%c0_12, %c0_13] : memref<128x128xf32, #tpu.memory_space<vmem>>, vector<128x128xf32>
    %cst_14 = arith.constant dense<0.000000e+00> : vector<32x128xf32>
    %22 = tpu.matmul %19, %21, %cst_14 {dimension_numbers = #tpu.dot_dimension_numbers<[1], [0], [0], [1], [0, 0, 1, 1], [], []>} : vector<32x128xf32>, vector<128x128xf32>, vector<32x128xf32> -> vector<32x128xf32>
    %c0_15 = arith.constant 0 : index
    %c0_16 = arith.constant 0 : index
    %23 = vector.load %arg6[%c0_15, %c0_16] : memref<1x128xf32, #tpu.memory_space<vmem>>, vector<1x128xf32>
    %24 = vector.broadcast %23 : vector<1x128xf32> to vector<32x128xf32>
    %25 = arith.addf %22, %24 : vector<32x128xf32>
    %cst_17 = arith.constant dense<0xFF800000> : vector<32xf32>
    %26 = vector.multi_reduction <maximumf>, %25, %cst_17 [1] : vector<32x128xf32> to vector<32xf32>
    %27 = vector.shape_cast %26 : vector<32xf32> to vector<32x1xf32>
    %28 = vector.broadcast %27 : vector<32x1xf32> to vector<32x128xf32>
    %29 = arith.subf %25, %28 : vector<32x128xf32>
    %30 = math.exp %29 : vector<32x128xf32>
    %cst_18 = arith.constant dense<0.000000e+00> : vector<32xf32>
    %31 = vector.multi_reduction <add>, %30, %cst_18 [1] : vector<32x128xf32> to vector<32xf32>
    %32 = vector.shape_cast %31 : vector<32xf32> to vector<32x1xf32>
    %33 = math.log %32 : vector<32x1xf32>
    %34 = vector.broadcast %33 : vector<32x1xf32> to vector<32x128xf32>
    %35 = arith.subf %29, %34 : vector<32x128xf32>
    %36 = tpu.iota {dimensions = array<i32: 1>} : vector<32x128xi32>
    %c0_19 = arith.constant 0 : index
    %c0_20 = arith.constant 0 : index
    %37 = vector.load %arg7[%c0_19, %c0_20] : memref<32x1xi32, #tpu.memory_space<vmem>>, vector<32x1xi32>
    %38 = vector.broadcast %37 : vector<32x1xi32> to vector<32x128xi32>
    %39 = arith.cmpi eq, %36, %38 : vector<32x128xi32>
    %cst_21 = arith.constant 0.000000e+00 : f32
    %40 = vector.broadcast %cst_21 : f32 to vector<32x128xf32>
    %41 = arith.select %39, %35, %40 : vector<32x128xi1>, vector<32x128xf32>
    %cst_22 = arith.constant dense<0.000000e+00> : vector<32xf32>
    %42 = vector.multi_reduction <add>, %41, %cst_22 [1] : vector<32x128xf32> to vector<32xf32>
    %43 = vector.shape_cast %42 : vector<32xf32> to vector<32x1xf32>
    %c127_i32 = arith.constant 127 : i32
    %44 = vector.broadcast %c127_i32 : i32 to vector<32x128xi32>
    %45 = arith.cmpi eq, %36, %44 : vector<32x128xi32>
    %cst_23 = arith.constant 0.000000e+00 : f32
    %46 = vector.broadcast %cst_23 : f32 to vector<32x1xf32>
    %47 = arith.subf %46, %43 : vector<32x1xf32>
    %48 = vector.shape_cast %47 : vector<32x1xf32> to vector<32x1xf32>
    %49 = vector.broadcast %48 : vector<32x1xf32> to vector<32x128xf32>
    %50 = arith.select %45, %49, %25 : vector<32x128xi1>, vector<32x128xf32>
    %c0_24 = arith.constant 0 : index
    %c0_25 = arith.constant 0 : index
    %51 = vector.load %arg8[%c0_24, %c0_25] : memref<32x128xf32, #tpu.memory_space<vmem>>, vector<32x128xf32>
    tpu.vector_store %arg8[%c0_24, %c0_25], %50 {strides = array<i32>} : memref<32x128xf32, #tpu.memory_space<vmem>>, vector<32x128xf32>,
    return
  }
  func.func @transform_0(%arg0: i32) -> (i32, i32) {
    %c0_i32 = arith.constant 0 : i32
    %c0_i32_0 = arith.constant 0 : i32
    return %arg0, %c0_i32 : i32, i32
  }
  func.func @transform_1(%arg0: i32) -> (i32, i32) {
    %c0_i32 = arith.constant 0 : i32
    %c0_i32_0 = arith.constant 0 : i32
    %c0_i32_1 = arith.constant 0 : i32
    return %c0_i32, %c0_i32_0 : i32, i32
  }
  func.func @transform_2(%arg0: i32) -> (i32, i32) {
    %c0_i32 = arith.constant 0 : i32
    %c0_i32_0 = arith.constant 0 : i32
    %c0_i32_1 = arith.constant 0 : i32
    return %c0_i32, %c0_i32_0 : i32, i32
  }
  func.func @transform_3(%arg0: i32) -> (i32, i32) {
    %c0_i32 = arith.constant 0 : i32
    %c0_i32_0 = arith.constant 0 : i32
    %c0_i32_1 = arith.constant 0 : i32
    return %c0_i32, %c0_i32_0 : i32, i32
  }
  func.func @transform_4(%arg0: i32) -> (i32, i32) {
    %c0_i32 = arith.constant 0 : i32
    %c0_i32_0 = arith.constant 0 : i32
    %c0_i32_1 = arith.constant 0 : i32
    return %c0_i32, %c0_i32_0 : i32, i32
  }
  func.func @transform_5(%arg0: i32) -> (i32, i32) {
    %c0_i32 = arith.constant 0 : i32
    %c0_i32_0 = arith.constant 0 : i32
    %c0_i32_1 = arith.constant 0 : i32
    return %c0_i32, %c0_i32_0 : i32, i32
  }
  func.func @transform_6(%arg0: i32) -> (i32, i32) {
    %c0_i32 = arith.constant 0 : i32
    %c0_i32_0 = arith.constant 0 : i32
    return %arg0, %c0_i32 : i32, i32
  }
  func.func @transform_7(%arg0: i32) -> (i32, i32) {
    %c0_i32 = arith.constant 0 : i32
    %c0_i32_0 = arith.constant 0 : i32
    return %arg0, %c0_i32 : i32, i32
  }
  func.func @transform_8(%arg0: i32) -> (i32, i32) {
    %c0_i32 = arith.constant 0 : i32
    %c0_i32_0 = arith.constant 0 : i32
    return %arg0, %c0_i32 : i32, i32
  }
}

</mosaic_0001>

<llo_original>
// kernel: tpu_custom_call.1
$region0: #{tpu_custom_call.1}
  #allocation0 [shape = 'u32[]', space=smem, size = 0x4, offset = 0x4, fixed_abs, tag = 'smem constant byte address 0x4 - core index']
  #allocation1 [shape = 'u32[144,128]{1,0:T(1,128)}', space=vmem, size = 0x12000, scoped, tag = 'internal scratch']
  %s0 = inlined_call_operand.vmem [shape: s32[512,1], index: 0, kind: input, shape index: {}]
  %s1 = inlined_call_operand.vmem [shape: bf16[64,128], index: 1, kind: input, shape index: {}]
  %s2 = inlined_call_operand.vmem [shape: bf16[128,128], index: 2, kind: input, shape index: {}]
  %s3 = inlined_call_operand.vmem [shape: f32[1,128], index: 3, kind: input, shape index: {}]
  %s4 = inlined_call_operand.vmem [shape: f32[128,128], index: 4, kind: input, shape index: {}]
  %s5 = inlined_call_operand.vmem [shape: f32[1,128], index: 5, kind: input, shape index: {}]
  %s6 = inlined_call_operand.vmem [shape: s32[64,1], index: 6, kind: input, shape index: {}]
  %s7 = inlined_call_operand.hbm [shape: f32[64,128], index: 7, kind: output, shape index: {0}]
  %s8 = inlined_call_operand.hbm [shape: f32[64,128], index: 8, kind: output, shape index: {1}]
  %9 = xla_tuple %s7, %s8
  %s10 = sld [smem:[#allocation0]]
  $region69: #{tpu_custom_call.1} parent=0
    _
  %s12 = ssub.s32 1, %s10
  %s13 = scalar_select 0, %s12, %s10
  $region1: #{tpu_custom_call.1} parent=0
    #allocation2 [shape = 'u8[32768]{0}', space=vmem, size = 0x8000, scoped, tag = 'output window, operand 0']
    #allocation3 [shape = 's32[2]{0}', space=sflag, size = 0x8, scoped, tag = 'scoped memory for tpu_custom_call.1']
    #allocation4 [shape = 'u8[32768]{0}', space=vmem, size = 0x8000, scoped, tag = 'output window, operand 1']
    #allocation5 [shape = 's32[2]{0}', space=sflag, size = 0x8, scoped, tag = 'scoped memory for tpu_custom_call.1']
    %14 = vsyncpa [#allocation3], 0
    %s15 = scalar_lea.sflag [#allocation3], 1
    %16 = vsyncpa %s15, 0
    %17 = vsyncpa [#allocation5], 0
    %s18 = scalar_lea.sflag [#allocation5], 1
    %19 = vsyncpa %s18, 0
    loop: start=0, step=1, limit=4
    $region2: #{tpu_custom_call.1} parent=1 // loop_pre_header
      _
    $region3: #{tpu_custom_call.1} parent=1 // loop_header
      %s21 = sphi 0, %s25
      %p22 = scmp.ge.s32.totalorder %s21, 4
      %s31 = sphi 0, %s33
      %s34 = sphi 0, %s31
      %s35 = sphi 0, %s34
      %s51 = sphi 0, %s35
      %s55 = sphi 0, %s55
      %s57 = sphi 0, %s55
      %s58 = sphi 0, %s57
      %s72 = sphi 0, %s58
      %s76 = sphi 0, %s76
      %s78 = sphi 0, %s76
      %s79 = sphi 0, %s78
      %s93 = sphi 0, %s79
      %s97 = sphi 0, %s97
      %s99 = sphi 0, %s97
      %s100 = sphi 0, %s99
      %s114 = sphi 0, %s100
      %s118 = sphi 0, %s118
      %s120 = sphi 0, %s118
      %s121 = sphi 0, %s120
      %s135 = sphi 0, %s121
      %s139 = sphi 0, %s139
      %s141 = sphi 0, %s139
      %s142 = sphi 0, %s141
      %s156 = sphi 0, %s142
      %s162 = sphi 0, %s164
      %s165 = sphi 0, %s162
      %s166 = sphi 0, %s165
      %s182 = sphi 0, %s166
      %s188 = sphi 0, %s190
      %s191 = sphi 0, %s188
      %s192 = sphi 0, %s191
      %s208 = sphi 0, %s192
      %s214 = sphi 0, %s216
      %s217 = sphi 0, %s214
      %s218 = sphi 0, %s217
      %s234 = sphi 0, %s218
    $region4: #{tpu_custom_call.1} parent=1 // loop_header_branch
      %24 = sbr.rel (%p22) target = $region8
    $region5: #{tpu_custom_call.1} parent=1 // loop_body
      %s26 = ssub.s32 %s21, 1
      %s27 = ssub.s32 %s21, 2
      %s28 = sadd.s32 %s21, 1
      %s29 = ssub.s32 %s21, %s28
      %p30 = scmp.eq.s32.totalorder %s29, 0
      %s32 = sadd.s32 %s31, 1
      %s33 = scalar_select %p30, %s31, %s32
      %p36 = pneg %p30
      %p37 = scmp.eq.s32.totalorder %s21, 1
      %p38 = por %p36, %p37
      %p39 = scmp.ne.s32.totalorder %s31, %s34
      %p40 = scmp.eq.s32.totalorder %s21, 0
      %p41 = por %p39, %p40
      %p42 = scmp.ne.s32.totalorder %s31, %s34
      %p43 = scmp.eq.s32.totalorder %s26, 1
      %p44 = por %p42, %p43
      %p45 = scmp.ne.s32.totalorder %s34, %s35
      %p46 = scmp.eq.s32.totalorder %s26, 0
      %p47 = por %p45, %p46
      %p48 = scmp.ne.s32.totalorder %s34, %s35
      %p49 = scmp.eq.s32.totalorder %s27, 1
      %p50 = por %p48, %p49
      %p52 = scmp.ne.s32.totalorder %s35, %s51
      %p53 = scmp.eq.s32.totalorder %s27, 0
      %p54 = por %p52, %p53
      %s56 = sadd.s32 %s55, 1
      %p59 = scmp.eq.s32.totalorder %s21, 1
      %p60 = scmp.ne.s32.totalorder %s55, %s57
      %p61 = scmp.eq.s32.totalorder %s21, 0
      %p62 = por %p60, %p61
      %p63 = scmp.ne.s32.totalorder %s55, %s57
      %p64 = scmp.eq.s32.totalorder %s26, 1
      %p65 = por %p63, %p64
      %p66 = scmp.ne.s32.totalorder %s57, %s58
      %p67 = scmp.eq.s32.totalorder %s26, 0
      %p68 = por %p66, %p67
      %p69 = scmp.ne.s32.totalorder %s57, %s58
      %p70 = scmp.eq.s32.totalorder %s27, 1
      %p71 = por %p69, %p70
      %p73 = scmp.ne.s32.totalorder %s58, %s72
      %p74 = scmp.eq.s32.totalorder %s27, 0
      %p75 = por %p73, %p74
      %s77 = sadd.s32 %s76, 1
      %p80 = scmp.eq.s32.totalorder %s21, 1
      %p81 = scmp.ne.s32.totalorder %s76, %s78
      %p82 = scmp.eq.s32.totalorder %s21, 0
      %p83 = por %p81, %p82
      %p84 = scmp.ne.s32.totalorder %s76, %s78
      %p85 = scmp.eq.s32.totalorder %s26, 1
      %p86 = por %p84, %p85
      %p87 = scmp.ne.s32.totalorder %s78, %s79
      %p88 = scmp.eq.s32.totalorder %s26, 0
      %p89 = por %p87, %p88
      %p90 = scmp.ne.s32.totalorder %s78, %s79
      %p91 = scmp.eq.s32.totalorder %s27, 1
      %p92 = por %p90, %p91
      %p94 = scmp.ne.s32.totalorder %s79, %s93
      %p95 = scmp.eq.s32.totalorder %s27, 0
      %p96 = por %p94, %p95
      %s98 = sadd.s32 %s97, 1
      %p101 = scmp.eq.s32.totalorder %s21, 1
      %p102 = scmp.ne.s32.totalorder %s97, %s99
      %p103 = scmp.eq.s32.totalorder %s21, 0
      %p104 = por %p102, %p103
      %p105 = scmp.ne.s32.totalorder %s97, %s99
      %p106 = scmp.eq.s32.totalorder %s26, 1
      %p107 = por %p105, %p106
      %p108 = scmp.ne.s32.totalorder %s99, %s100
      %p109 = scmp.eq.s32.totalorder %s26, 0
      %p110 = por %p108, %p109
      %p111 = scmp.ne.s32.totalorder %s99, %s100
      %p112 = scmp.eq.s32.totalorder %s27, 1
      %p113 = por %p111, %p112
      %p115 = scmp.ne.s32.totalorder %s100, %s114
      %p116 = scmp.eq.s32.totalorder %s27, 0
      %p117 = por %p115, %p116
      %s119 = sadd.s32 %s118, 1
      %p122 = scmp.eq.s32.totalorder %s21, 1
      %p123 = scmp.ne.s32.totalorder %s118, %s120
      %p124 = scmp.eq.s32.totalorder %s21, 0
      %p125 = por %p123, %p124
      %p126 = scmp.ne.s32.totalorder %s118, %s120
      %p127 = scmp.eq.s32.totalorder %s26, 1
      %p128 = por %p126, %p127
      %p129 = scmp.ne.s32.totalorder %s120, %s121
      %p130 = scmp.eq.s32.totalorder %s26, 0
      %p131 = por %p129, %p130
      %p132 = scmp.ne.s32.totalorder %s120, %s121
      %p133 = scmp.eq.s32.totalorder %s27, 1
      %p134 = por %p132, %p133
      %p136 = scmp.ne.s32.totalorder %s121, %s135
      %p137 = scmp.eq.s32.totalorder %s27, 0
      %p138 = por %p136, %p137
      %s140 = sadd.s32 %s139, 1
      %p143 = scmp.eq.s32.totalorder %s21, 1
      %p144 = scmp.ne.s32.totalorder %s139, %s141
      %p145 = scmp.eq.s32.totalorder %s21, 0
      %p146 = por %p144, %p145
      %p147 = scmp.ne.s32.totalorder %s139, %s141
      %p148 = scmp.eq.s32.totalorder %s26, 1
      %p149 = por %p147, %p148
      %p150 = scmp.ne.s32.totalorder %s141, %s142
      %p151 = scmp.eq.s32.totalorder %s26, 0
      %p152 = por %p150, %p151
      %p153 = scmp.ne.s32.totalorder %s141, %s142
      %p154 = scmp.eq.s32.totalorder %s27, 1
      %p155 = por %p153, %p154
      %p157 = scmp.ne.s32.totalorder %s142, %s156
      %p158 = scmp.eq.s32.totalorder %s27, 0
      %p159 = por %p157, %p158
      %s160 = ssub.s32 %s21, %s28
      %p161 = scmp.eq.s32.totalorder %s160, 0
      %s163 = sadd.s32 %s162, 1
      %s164 = scalar_select %p161, %s162, %s163
      %p167 = pneg %p161
      %p168 = scmp.eq.s32.totalorder %s21, 1
      %p169 = por %p167, %p168
      %p170 = scmp.ne.s32.totalorder %s162, %s165
      %p171 = scmp.eq.s32.totalorder %s21, 0
      %p172 = por %p170, %p171
      %p173 = scmp.ne.s32.totalorder %s162, %s165
      %p174 = scmp.eq.s32.totalorder %s26, 1
      %p175 = por %p173, %p174
      %p176 = scmp.ne.s32.totalorder %s165, %s166
      %p177 = scmp.eq.s32.totalorder %s26, 0
      %p178 = por %p176, %p177
      %p179 = scmp.ne.s32.totalorder %s165, %s166
      %p180 = scmp.eq.s32.totalorder %s27, 1
      %p181 = por %p179, %p180
      %p183 = scmp.ne.s32.totalorder %s166, %s182
      %p184 = scmp.eq.s32.totalorder %s27, 0
      %p185 = por %p183, %p184
      %s186 = ssub.s32 %s21, %s28
      %p187 = scmp.eq.s32.totalorder %s186, 0
      %s189 = sadd.s32 %s188, 1
      %s190 = scalar_select %p187, %s188, %s189
      %p193 = pneg %p187
      %p194 = scmp.eq.s32.totalorder %s21, 1
      %p195 = por %p193, %p194
      %p196 = scmp.ne.s32.totalorder %s188, %s191
      %p197 = scmp.eq.s32.totalorder %s21, 0
      %p198 = por %p196, %p197
      %p199 = scmp.ne.s32.totalorder %s188, %s191
      %p200 = scmp.eq.s32.totalorder %s26, 1
      %p201 = por %p199, %p200
      %p202 = scmp.ne.s32.totalorder %s191, %s192
      %p203 = scmp.eq.s32.totalorder %s26, 0
      %p204 = por %p202, %p203
      %p205 = scmp.ne.s32.totalorder %s191, %s192
      %p206 = scmp.eq.s32.totalorder %s27, 1
      %p207 = por %p205, %p206
      %p209 = scmp.ne.s32.totalorder %s192, %s208
      %p210 = scmp.eq.s32.totalorder %s27, 0
      %p211 = por %p209, %p210
      %s212 = ssub.s32 %s21, %s28
      %p213 = scmp.eq.s32.totalorder %s212, 0
      %s215 = sadd.s32 %s214, 1
      %s216 = scalar_select %p213, %s214, %s215
      %p219 = pneg %p213
      %p220 = scmp.eq.s32.totalorder %s21, 1
      %p221 = por %p219, %p220
      %p222 = scmp.ne.s32.totalorder %s214, %s217
      %p223 = scmp.eq.s32.totalorder %s21, 0
      %p224 = por %p222, %p223
      %p225 = scmp.ne.s32.totalorder %s214, %s217
      %p226 = scmp.eq.s32.totalorder %s26, 1
      %p227 = por %p225, %p226
      %p228 = scmp.ne.s32.totalorder %s217, %s218
      %p229 = scmp.eq.s32.totalorder %s26, 0
      %p230 = por %p228, %p229
      %p231 = scmp.ne.s32.totalorder %s217, %s218
      %p232 = scmp.eq.s32.totalorder %s27, 1
      %p233 = por %p231, %p232
      %p235 = scmp.ne.s32.totalorder %s218, %s234
      %p236 = scmp.eq.s32.totalorder %s27, 0
      %p237 = por %p235, %p236
      %p238 = scmp.le.s32.totalorder 1, %s21
      %p239 = scmp.lt.s32.totalorder %s21, 3
      %p240 = pnand %p238, %p239
      %p241 = pneg %p240
      // Predicated region
      $region9: #{tpu_custom_call.1} parent=5 // pred_check
        _
      $region10: #{tpu_custom_call.1} parent=5 // pred_check_branch
        %243 = sbr.rel (%p240) target = $region12
      $region11: #{tpu_custom_call.1} parent=5 // pred_region
        %s244 = ssub.s32 %s21, 1
        // Predicated region
        $region13: #{tpu_custom_call.1} parent=11 // pred_check
          %p245 = pneg %p68
        $region14: #{tpu_custom_call.1} parent=11 // pred_check_branch
          %247 = sbr.rel (%p245) target = $region16
        $region15: #{tpu_custom_call.1} parent=11 // pred_region
          _
        $region16: #{tpu_custom_call.1} parent=11 // pred_fallthru
          _
        // Predicated region
        $region17: #{tpu_custom_call.1} parent=11 // pred_check
          %p248 = pneg %p89
        $region18: #{tpu_custom_call.1} parent=11 // pred_check_branch
          %250 = sbr.rel (%p248) target = $region20
        $region19: #{tpu_custom_call.1} parent=11 // pred_region
          _
        $region20: #{tpu_custom_call.1} parent=11 // pred_fallthru
          _
        // Predicated region
        $region21: #{tpu_custom_call.1} parent=11 // pred_check
          %p251 = pneg %p110
        $region22: #{tpu_custom_call.1} parent=11 // pred_check_branch
          %253 = sbr.rel (%p251) target = $region24
        $region23: #{tpu_custom_call.1} parent=11 // pred_region
          _
        $region24: #{tpu_custom_call.1} parent=11 // pred_fallthru
          _
        // Predicated region
        $region25: #{tpu_custom_call.1} parent=11 // pred_check
          %p254 = pneg %p131
        $region26: #{tpu_custom_call.1} parent=11 // pred_check_branch
          %256 = sbr.rel (%p254) target = $region28
        $region27: #{tpu_custom_call.1} parent=11 // pred_region
          _
        $region28: #{tpu_custom_call.1} parent=11 // pred_fallthru
          _
        // Predicated region
        $region29: #{tpu_custom_call.1} parent=11 // pred_check
          %p257 = pneg %p152
        $region30: #{tpu_custom_call.1} parent=11 // pred_check_branch
          %259 = sbr.rel (%p257) target = $region32
        $region31: #{tpu_custom_call.1} parent=11 // pred_region
          _
        $region32: #{tpu_custom_call.1} parent=11 // pred_fallthru
          _
      $region12: #{tpu_custom_call.1} parent=5 // pred_fallthru
        _
      %p260 = scmp.lt.s32.totalorder %s21, 2
      // Predicated region
      $region33: #{tpu_custom_call.1} parent=5 // pred_check
        %p261 = pneg %p260
      $region34: #{tpu_custom_call.1} parent=5 // pred_check_branch
        %263 = sbr.rel (%p261) target = $region36
      $region35: #{tpu_custom_call.1} parent=5 // pred_region
        // Predicated region
        $region37: #{tpu_custom_call.1} parent=35 // pred_check
          %p264 = pneg %p41
        $region38: #{tpu_custom_call.1} parent=35 // pred_check_branch
          %266 = sbr.rel (%p264) target = $region40
        $region39: #{tpu_custom_call.1} parent=35 // pred_region
          %s267 = smul.u32 32, %s21
          %p268 = scmp.lt.s32.totalorder %s267, 63
          %s269 = scalar_select %p268, %s267, 63
          %s270 = smul.addr %s269, 8
          %s271 = scalar_lea.vmem %s0, %s270
          %s272 = smul.u32 32, %s21
        $region40: #{tpu_custom_call.1} parent=35 // pred_fallthru
          _
        // Predicated region
        $region41: #{tpu_custom_call.1} parent=35 // pred_check
          %p273 = pneg %p172
        $region42: #{tpu_custom_call.1} parent=35 // pred_check_branch
          %275 = sbr.rel (%p273) target = $region44
        $region43: #{tpu_custom_call.1} parent=35 // pred_region
          %s276 = smul.u32 4, %s21
          %p277 = scmp.lt.s32.totalorder %s276, 7
          %s278 = scalar_select %p277, %s276, 7
          %s279 = smul.addr %s278, 8
          %s280 = scalar_lea.vmem %s6, %s279
          %s281 = smul.u32 4, %s21
        $region44: #{tpu_custom_call.1} parent=35 // pred_fallthru
          _
      $region36: #{tpu_custom_call.1} parent=5 // pred_fallthru
        _
      %p282 = scmp.le.s32.totalorder 1, %s21
      %p283 = scmp.lt.s32.totalorder %s21, 3
      %p284 = pnand %p282, %p283
      %p285 = pneg %p284
      // Predicated region
      $region45: #{tpu_custom_call.1} parent=5 // pred_check
        _
      $region46: #{tpu_custom_call.1} parent=5 // pred_check_branch
        %287 = sbr.rel (%p284) target = $region48
      $region47: #{tpu_custom_call.1} parent=5 // pred_region
        %s288 = ssub.s32 %s21, 1
        %s289 = smul.u32 32, %s26
        %p290 = scmp.lt.s32.totalorder %s289, 63
        %s291 = scalar_select %p290, %s289, 63
        %s292 = smul.addr %s291, 8
        %s293 = scalar_lea.vmem %s0, %s292
        %p294 = pneg %p47
        %p295 = pneg %p44
        %p296 = pneg %p68
        %p297 = pneg %p65
        %p298 = pneg %p89
        %p299 = pneg %p86
        %p300 = pneg %p110
        %p301 = pneg %p107
        %p302 = pneg %p131
        %p303 = pneg %p128
        %p304 = pneg %p152
        %p305 = pneg %p149
        %s306 = smul.u32 4, %s26
        %p307 = scmp.lt.s32.totalorder %s306, 7
        %s308 = scalar_select %p307, %s306, 7
        %s309 = smul.addr %s308, 8
        %s310 = scalar_lea.vmem %s6, %s309
        %p311 = pneg %p178
        %p312 = pneg %p175
        %p313 = pneg %p204
        %p314 = pneg %p201
        %s315 = sand.u32 %s191, 1
        %s316 = scalar_lea.sflag [#allocation3], %s315
        %s317 = sand.u32 %s191, 1
        %s318 = smul.addr %s317, 32
        %s319 = scalar_lea.vmem [#allocation2], %s318
        %p320 = pneg %p230
        %p321 = pneg %p227
        %s322 = sand.u32 %s217, 1
        %s323 = scalar_lea.sflag [#allocation5], %s322
        %s324 = sand.u32 %s217, 1
        %s325 = smul.addr %s324, 32
        %s326 = scalar_lea.vmem [#allocation4], %s325
        %s327 = smul.u32 32, %s26
        %p328 = scmp.lt.s32.totalorder %s327, 63
        %s329 = scalar_select %p328, %s327, 63
        %s330 = smul.addr %s329, 8
        %s331 = scalar_lea.vmem %s0, %s330
        %s332 = smul.u32 32, %s26
        %s333 = smul.u32 4, %s26
        %p334 = scmp.lt.s32.totalorder %s333, 7
        %s335 = scalar_select %p334, %s333, 7
        %s336 = smul.addr %s335, 8
        %s337 = scalar_lea.vmem %s6, %s336
        %s338 = smul.u32 4, %s26
        %s339 = smul.u32 4, %s26
        %s340 = smul.u32 4, %s26
        %v342 = vld [vmem:[%s331] sm:$0xff]
        %v343 = vld [vmem:[%s331 + $0x8] sm:$0xff]
        %v344 = vld [vmem:[%s331 + $0x10] sm:$0xff]
        %v345 = vld [vmem:[%s331 + $0x18] sm:$0xff]
        %v346 = vld [vmem:[%s331 + $0x20] sm:$0xff]
        %v347 = vld [vmem:[%s331 + $0x28] sm:$0xff]
        %v348 = vld [vmem:[%s331 + $0x30] sm:$0xff]
        %v349 = vld [vmem:[%s331 + $0x38] sm:$0xff]
        %v350 = vld [vmem:[%s331 + $0x40] sm:$0xff]
        %v351 = vld [vmem:[%s331 + $0x48] sm:$0xff]
        %v352 = vld [vmem:[%s331 + $0x50] sm:$0xff]
        %v353 = vld [vmem:[%s331 + $0x58] sm:$0xff]
        %v354 = vld [vmem:[%s331 + $0x60] sm:$0xff]
        %v355 = vld [vmem:[%s331 + $0x68] sm:$0xff]
        %v356 = vld [vmem:[%s331 + $0x70] sm:$0xff]
        %v357 = vld [vmem:[%s331 + $0x78] sm:$0xff]
        %v358 = vld [vmem:[%s331 + $0x80] sm:$0xff]
        %v359 = vld [vmem:[%s331 + $0x88] sm:$0xff]
        %v360 = vld [vmem:[%s331 + $0x90] sm:$0xff]
        %v361 = vld [vmem:[%s331 + $0x98] sm:$0xff]
        %v362 = vld [vmem:[%s331 + $0xa0] sm:$0xff]
        %v363 = vld [vmem:[%s331 + $0xa8] sm:$0xff]
        %v364 = vld [vmem:[%s331 + $0xb0] sm:$0xff]
        %v365 = vld [vmem:[%s331 + $0xb8] sm:$0xff]
        %v366 = vld [vmem:[%s331 + $0xc0] sm:$0xff]
        %v367 = vld [vmem:[%s331 + $0xc8] sm:$0xff]
        %v368 = vld [vmem:[%s331 + $0xd0] sm:$0xff]
        %v369 = vld [vmem:[%s331 + $0xd8] sm:$0xff]
        %v370 = vld [vmem:[%s331 + $0xe0] sm:$0xff]
        %v371 = vld [vmem:[%s331 + $0xe8] sm:$0xff]
        %v372 = vld [vmem:[%s331 + $0xf0] sm:$0xff]
        %v373 = vld [vmem:[%s331 + $0xf8] sm:$0xff]
        %v374 = vlaneseq
        %v375 = vand.u32 %v374, 127
        %376 = vset.pattern.permute.xlu0 0
        %377 = vperm.xlu0 %376, %v342
        %v378 = vpop.permute.xlu0 %377
        %379 = vset.pattern.permute.xlu0 0
        %380 = vperm.xlu0 %379, %v343
        %v381 = vpop.permute.xlu0 %380
        %382 = vset.pattern.permute.xlu0 0
        %383 = vperm.xlu0 %382, %v344
        %v384 = vpop.permute.xlu0 %383
        %385 = vset.pattern.permute.xlu0 0
        %386 = vperm.xlu0 %385, %v345
        %v387 = vpop.permute.xlu0 %386
        %388 = vset.pattern.permute.xlu0 0
        %389 = vperm.xlu0 %388, %v346
        %v390 = vpop.permute.xlu0 %389
        %391 = vset.pattern.permute.xlu0 0
        %392 = vperm.xlu0 %391, %v347
        %v393 = vpop.permute.xlu0 %392
        %394 = vset.pattern.permute.xlu0 0
        %395 = vperm.xlu0 %394, %v348
        %v396 = vpop.permute.xlu0 %395
        %397 = vset.pattern.permute.xlu0 0
        %398 = vperm.xlu0 %397, %v349
        %v399 = vpop.permute.xlu0 %398
        %400 = vset.pattern.permute.xlu0 0
        %401 = vperm.xlu0 %400, %v350
        %v402 = vpop.permute.xlu0 %401
        %403 = vset.pattern.permute.xlu0 0
        %404 = vperm.xlu0 %403, %v351
        %v405 = vpop.permute.xlu0 %404
        %406 = vset.pattern.permute.xlu0 0
        %407 = vperm.xlu0 %406, %v352
        %v408 = vpop.permute.xlu0 %407
        %409 = vset.pattern.permute.xlu0 0
        %410 = vperm.xlu0 %409, %v353
        %v411 = vpop.permute.xlu0 %410
        %412 = vset.pattern.permute.xlu0 0
        %413 = vperm.xlu0 %412, %v354
        %v414 = vpop.permute.xlu0 %413
        %415 = vset.pattern.permute.xlu0 0
        %416 = vperm.xlu0 %415, %v355
        %v417 = vpop.permute.xlu0 %416
        %418 = vset.pattern.permute.xlu0 0
        %419 = vperm.xlu0 %418, %v356
        %v420 = vpop.permute.xlu0 %419
        %421 = vset.pattern.permute.xlu0 0
        %422 = vperm.xlu0 %421, %v357
        %v423 = vpop.permute.xlu0 %422
        %424 = vset.pattern.permute.xlu0 0
        %425 = vperm.xlu0 %424, %v358
        %v426 = vpop.permute.xlu0 %425
        %427 = vset.pattern.permute.xlu0 0
        %428 = vperm.xlu0 %427, %v359
        %v429 = vpop.permute.xlu0 %428
        %430 = vset.pattern.permute.xlu0 0
        %431 = vperm.xlu0 %430, %v360
        %v432 = vpop.permute.xlu0 %431
        %433 = vset.pattern.permute.xlu0 0
        %434 = vperm.xlu0 %433, %v361
        %v435 = vpop.permute.xlu0 %434
        %436 = vset.pattern.permute.xlu0 0
        %437 = vperm.xlu0 %436, %v362
        %v438 = vpop.permute.xlu0 %437
        %439 = vset.pattern.permute.xlu0 0
        %440 = vperm.xlu0 %439, %v363
        %v441 = vpop.permute.xlu0 %440
        %442 = vset.pattern.permute.xlu0 0
        %443 = vperm.xlu0 %442, %v364
        %v444 = vpop.permute.xlu0 %443
        %445 = vset.pattern.permute.xlu0 0
        %446 = vperm.xlu0 %445, %v365
        %v447 = vpop.permute.xlu0 %446
        %448 = vset.pattern.permute.xlu0 0
        %449 = vperm.xlu0 %448, %v366
        %v450 = vpop.permute.xlu0 %449
        %451 = vset.pattern.permute.xlu0 0
        %452 = vperm.xlu0 %451, %v367
        %v453 = vpop.permute.xlu0 %452
        %454 = vset.pattern.permute.xlu0 0
        %455 = vperm.xlu0 %454, %v368
        %v456 = vpop.permute.xlu0 %455
        %457 = vset.pattern.permute.xlu0 0
        %458 = vperm.xlu0 %457, %v369
        %v459 = vpop.permute.xlu0 %458
        %460 = vset.pattern.permute.xlu0 0
        %461 = vperm.xlu0 %460, %v370
        %v462 = vpop.permute.xlu0 %461
        %463 = vset.pattern.permute.xlu0 0
        %464 = vperm.xlu0 %463, %v371
        %v465 = vpop.permute.xlu0 %464
        %466 = vset.pattern.permute.xlu0 0
        %467 = vperm.xlu0 %466, %v372
        %v468 = vpop.permute.xlu0 %467
        %469 = vset.pattern.permute.xlu0 0
        %470 = vperm.xlu0 %469, %v373
        %v471 = vpop.permute.xlu0 %470
        %vm472 = vcmp.eq.s32.totalorder %v375, %v378
        %vm473 = vcmp.eq.s32.totalorder %v375, %v381
        %vm474 = vcmp.eq.s32.totalorder %v375, %v384
        %vm475 = vcmp.eq.s32.totalorder %v375, %v387
        %vm476 = vcmp.eq.s32.totalorder %v375, %v390
        %vm477 = vcmp.eq.s32.totalorder %v375, %v393
        %vm478 = vcmp.eq.s32.totalorder %v375, %v396
        %vm479 = vcmp.eq.s32.totalorder %v375, %v399
        %vm480 = vcmp.eq.s32.totalorder %v375, %v402
        %vm481 = vcmp.eq.s32.totalorder %v375, %v405
        %vm482 = vcmp.eq.s32.totalorder %v375, %v408
        %vm483 = vcmp.eq.s32.totalorder %v375, %v411
        %vm484 = vcmp.eq.s32.totalorder %v375, %v414
        %vm485 = vcmp.eq.s32.totalorder %v375, %v417
        %vm486 = vcmp.eq.s32.totalorder %v375, %v420
        %vm487 = vcmp.eq.s32.totalorder %v375, %v423
        %vm488 = vcmp.eq.s32.totalorder %v375, %v426
        %vm489 = vcmp.eq.s32.totalorder %v375, %v429
        %vm490 = vcmp.eq.s32.totalorder %v375, %v432
        %vm491 = vcmp.eq.s32.totalorder %v375, %v435
        %vm492 = vcmp.eq.s32.totalorder %v375, %v438
        %vm493 = vcmp.eq.s32.totalorder %v375, %v441
        %vm494 = vcmp.eq.s32.totalorder %v375, %v444
        %vm495 = vcmp.eq.s32.totalorder %v375, %v447
        %vm496 = vcmp.eq.s32.totalorder %v375, %v450
        %vm497 = vcmp.eq.s32.totalorder %v375, %v453
        %vm498 = vcmp.eq.s32.totalorder %v375, %v456
        %vm499 = vcmp.eq.s32.totalorder %v375, %v459
        %vm500 = vcmp.eq.s32.totalorder %v375, %v462
        %vm501 = vcmp.eq.s32.totalorder %v375, %v465
        %vm502 = vcmp.eq.s32.totalorder %v375, %v468
        %vm503 = vcmp.eq.s32.totalorder %v375, %v471
        %v504 = vsel %vm472, 1, 0
        %v505 = vsel %vm473, 1, 0
        %v506 = vsel %vm474, 1, 0
        %v507 = vsel %vm475, 1, 0
        %v508 = vsel %vm476, 1, 0
        %v509 = vsel %vm477, 1, 0
        %v510 = vsel %vm478, 1, 0
        %v511 = vsel %vm479, 1, 0
        %v512 = vsel %vm480, 1, 0
        %v513 = vsel %vm481, 1, 0
        %v514 = vsel %vm482, 1, 0
        %v515 = vsel %vm483, 1, 0
        %v516 = vsel %vm484, 1, 0
        %v517 = vsel %vm485, 1, 0
        %v518 = vsel %vm486, 1, 0
        %v519 = vsel %vm487, 1, 0
        %v520 = vsel %vm488, 1, 0
        %v521 = vsel %vm489, 1, 0
        %v522 = vsel %vm490, 1, 0
        %v523 = vsel %vm491, 1, 0
        %v524 = vsel %vm492, 1, 0
        %v525 = vsel %vm493, 1, 0
        %v526 = vsel %vm494, 1, 0
        %v527 = vsel %vm495, 1, 0
        %v528 = vsel %vm496, 1, 0
        %v529 = vsel %vm497, 1, 0
        %v530 = vsel %vm498, 1, 0
        %v531 = vsel %vm499, 1, 0
        %v532 = vsel %vm500, 1, 0
        %v533 = vsel %vm501, 1, 0
        %v534 = vsel %vm502, 1, 0
        %v535 = vsel %vm503, 1, 0
        %v536 = vcvt.s32.f32 %v504
        %v537 = vcvt.s32.f32 %v505
        %v538 = vcvt.s32.f32 %v506
        %v539 = vcvt.s32.f32 %v507
        %v540 = vcvt.s32.f32 %v508
        %v541 = vcvt.s32.f32 %v509
        %v542 = vcvt.s32.f32 %v510
        %v543 = vcvt.s32.f32 %v511
        %v544 = vcvt.s32.f32 %v512
        %v545 = vcvt.s32.f32 %v513
        %v546 = vcvt.s32.f32 %v514
        %v547 = vcvt.s32.f32 %v515
        %v548 = vcvt.s32.f32 %v516
        %v549 = vcvt.s32.f32 %v517
        %v550 = vcvt.s32.f32 %v518
        %v551 = vcvt.s32.f32 %v519
        %v552 = vcvt.s32.f32 %v520
        %v553 = vcvt.s32.f32 %v521
        %v554 = vcvt.s32.f32 %v522
        %v555 = vcvt.s32.f32 %v523
        %v556 = vcvt.s32.f32 %v524
        %v557 = vcvt.s32.f32 %v525
        %v558 = vcvt.s32.f32 %v526
        %v559 = vcvt.s32.f32 %v527
        %v560 = vcvt.s32.f32 %v528
        %v561 = vcvt.s32.f32 %v529
        %v562 = vcvt.s32.f32 %v530
        %v563 = vcvt.s32.f32 %v531
        %v564 = vcvt.s32.f32 %v532
        %v565 = vcvt.s32.f32 %v533
        %v566 = vcvt.s32.f32 %v534
        %v567 = vcvt.s32.f32 %v535
        %v568 = vpack.c.bf16 %v537, %v536
        %v569 = vpack.c.bf16 %v539, %v538
        %v570 = vpack.c.bf16 %v541, %v540
        %v571 = vpack.c.bf16 %v543, %v542
        %v572 = vpack.c.bf16 %v545, %v544
        %v573 = vpack.c.bf16 %v547, %v546
        %v574 = vpack.c.bf16 %v549, %v548
        %v575 = vpack.c.bf16 %v551, %v550
        %v576 = vpack.c.bf16 %v553, %v552
        %v577 = vpack.c.bf16 %v555, %v554
        %v578 = vpack.c.bf16 %v557, %v556
        %v579 = vpack.c.bf16 %v559, %v558
        %v580 = vpack.c.bf16 %v561, %v560
        %v581 = vpack.c.bf16 %v563, %v562
        %v582 = vpack.c.bf16 %v565, %v564
        %v583 = vpack.c.bf16 %v567, %v566
        %v584 = vld [vmem:[%s1] sm:$0xf]
        %v585 = vld [vmem:[%s1 + $0x4] sm:$0xf]
        %v586 = vld [vmem:[%s1 + $0x8] sm:$0xf]
        %v587 = vld [vmem:[%s1 + $0xc] sm:$0xf]
        %v588 = vld [vmem:[%s1 + $0x10] sm:$0xf]
        %v589 = vld [vmem:[%s1 + $0x14] sm:$0xf]
        %v590 = vld [vmem:[%s1 + $0x18] sm:$0xf]
        %v591 = vld [vmem:[%s1 + $0x1c] sm:$0xf]
        %v600 = vunpack.c.l.b16 %v584
        %v601 = vunpack.c.l.b16 %v585
        %v602 = vunpack.c.l.b16 %v586
        %v603 = vunpack.c.l.b16 %v587
        %v604 = vunpack.c.l.b16 %v588
        %v605 = vunpack.c.l.b16 %v589
        %v606 = vunpack.c.l.b16 %v590
        %v607 = vunpack.c.l.b16 %v591
        %v608 = vpack.c.b16 %v601, %v600
        %v609 = vpack.c.b16 %v603, %v602
        %v610 = vpack.c.b16 %v605, %v604
        %v611 = vpack.c.b16 %v607, %v606
        %vm616 = vcmask 523264
        %v618 = vsel %vm616, %v568, 0
        %v621 = vsel %vm616, %v569, 0
        %v624 = vsel %vm616, %v570, 0
        %v627 = vsel %vm616, %v571, 0
        %v630 = vsel %vm616, %v572, 0
        %v633 = vsel %vm616, %v573, 0
        %v636 = vsel %vm616, %v574, 0
        %v639 = vsel %vm616, %v575, 0
        %v642 = vsel %vm616, %v576, 0
        %v645 = vsel %vm616, %v577, 0
        %v648 = vsel %vm616, %v578, 0
        %v651 = vsel %vm616, %v579, 0
        %v654 = vsel %vm616, %v580, 0
        %v657 = vsel %vm616, %v581, 0
        %v660 = vsel %vm616, %v582, 0
        %v663 = vsel %vm616, %v583, 0
        %665 = vmatprep.subr.bf16.mxu0 0
        %666 = vmatpush1.bf16.msra.mxu0 %v608
        %667 = vmatprep.subr.bf16.mxu0 0
        %668 = vmatpush1.bf16.msra.mxu0 %v609
        %669 = vmatprep.subr.bf16.mxu0 0
        %670 = vmatpush1.bf16.msra.mxu0 %v610
        %671 = vmatprep.subr.bf16.mxu0 0
        %672 = vmatpush1.bf16.msra.mxu0 %v611
        %673 = vmatprep.subr.bf16.mxu0 0
        %674 = vmatpush1.bf16.msra.mxu0 0
        %675 = vmatprep.subr.bf16.mxu0 0
        %676 = vmatpush1.bf16.msra.mxu0 0
        %677 = vmatprep.subr.bf16.mxu0 0
        %678 = vmatpush1.bf16.msra.mxu0 0
        %679 = vmatprep.subr.bf16.mxu0 0
        %680 = vmatpush1.bf16.msra.mxu0 0
        %681 = vmatprep.subr.bf16.mxu0 0
        %682 = vmatpush1.bf16.msra.mxu0 0
        %683 = vmatprep.subr.bf16.mxu0 0
        %684 = vmatpush1.bf16.msra.mxu0 0
        %685 = vmatprep.subr.bf16.mxu0 0
        %686 = vmatpush1.bf16.msra.mxu0 0
        %687 = vmatprep.subr.bf16.mxu0 0
        %688 = vmatpush1.bf16.msra.mxu0 0
        %689 = vmatprep.subr.bf16.mxu0 0
        %690 = vmatpush1.bf16.msra.mxu0 0
        %691 = vmatprep.subr.bf16.mxu0 0
        %692 = vmatpush1.bf16.msra.mxu0 0
        %693 = vmatprep.subr.bf16.mxu0 0
        %694 = vmatpush1.bf16.msra.mxu0 0
        %695 = vmatprep.subr.bf16.mxu0 0
        %696 = vmatpush1.bf16.msra.mxu0 0
        %697 = vmatprep.mubr.bf16.mxu0 0
        %698 = vmatmul.mubr.bf16.gmra.mrb[0].mxu0 %v618
        %v699 = vpop.f32.mrb[0].mxu0
        %v700 = vadd.f32 0.0, %v699
        %v701 = vpop.f32.mrb[0].mxu0
        %v702 = vpop.f32.mrb[0].mxu0
        %v703 = vadd.f32 0.0, %v702
        %v704 = vpop.f32.mrb[0].mxu0
        %705 = vmatprep.mubr.bf16.mxu0 0
        %706 = vmatmul.mubr.bf16.gmra.mrb[0].mxu0 %v621
        %v707 = vpop.f32.mrb[0].mxu0
        %v708 = vadd.f32 0.0, %v707
        %v709 = vpop.f32.mrb[0].mxu0
        %v710 = vpop.f32.mrb[0].mxu0
        %v711 = vadd.f32 0.0, %v710
        %v712 = vpop.f32.mrb[0].mxu0
        %713 = vmatprep.mubr.bf16.mxu0 0
        %714 = vmatmul.mubr.bf16.gmra.mrb[0].mxu0 %v624
        %v715 = vpop.f32.mrb[0].mxu0
        %v716 = vadd.f32 0.0, %v715
        %v717 = vpop.f32.mrb[0].mxu0
        %v718 = vpop.f32.mrb[0].mxu0
        %v719 = vadd.f32 0.0, %v718
        %v720 = vpop.f32.mrb[0].mxu0
        %721 = vmatprep.mubr.bf16.mxu0 0
        %722 = vmatmul.mubr.bf16.gmra.mrb[0].mxu0 %v627
        %v723 = vpop.f32.mrb[0].mxu0
        %v724 = vadd.f32 0.0, %v723
        %v725 = vpop.f32.mrb[0].mxu0
        %v726 = vpop.f32.mrb[0].mxu0
        %v727 = vadd.f32 0.0, %v726
        %v728 = vpop.f32.mrb[0].mxu0
        %729 = vmatprep.mubr.bf16.mxu0 0
        %730 = vmatmul.mubr.bf16.gmra.mrb[0].mxu0 %v630
        %v731 = vpop.f32.mrb[0].mxu0
        %v732 = vadd.f32 0.0, %v731
        %v733 = vpop.f32.mrb[0].mxu0
        %v734 = vpop.f32.mrb[0].mxu0
        %v735 = vadd.f32 0.0, %v734
        %v736 = vpop.f32.mrb[0].mxu0
        %737 = vmatprep.mubr.bf16.mxu0 0
        %738 = vmatmul.mubr.bf16.gmra.mrb[0].mxu0 %v633
        %v739 = vpop.f32.mrb[0].mxu0
        %v740 = vadd.f32 0.0, %v739
        %v741 = vpop.f32.mrb[0].mxu0
        %v742 = vpop.f32.mrb[0].mxu0
        %v743 = vadd.f32 0.0, %v742
        %v744 = vpop.f32.mrb[0].mxu0
        %745 = vmatprep.mubr.bf16.mxu0 0
        %746 = vmatmul.mubr.bf16.gmra.mrb[0].mxu0 %v636
        %v747 = vpop.f32.mrb[0].mxu0
        %v748 = vadd.f32 0.0, %v747
        %v749 = vpop.f32.mrb[0].mxu0
        %v750 = vpop.f32.mrb[0].mxu0
        %v751 = vadd.f32 0.0, %v750
        %v752 = vpop.f32.mrb[0].mxu0
        %753 = vmatprep.mubr.bf16.mxu0 0
        %754 = vmatmul.mubr.bf16.gmra.mrb[0].mxu0 %v639
        %v755 = vpop.f32.mrb[0].mxu0
        %v756 = vadd.f32 0.0, %v755
        %v757 = vpop.f32.mrb[0].mxu0
        %v758 = vpop.f32.mrb[0].mxu0
        %v759 = vadd.f32 0.0, %v758
        %v760 = vpop.f32.mrb[0].mxu0
        %761 = vmatprep.mubr.bf16.mxu0 0
        %762 = vmatmul.mubr.bf16.gmra.mrb[0].mxu0 %v642
        %v763 = vpop.f32.mrb[0].mxu0
        %v764 = vadd.f32 0.0, %v763
        %v765 = vpop.f32.mrb[0].mxu0
        %v766 = vpop.f32.mrb[0].mxu0
        %v767 = vadd.f32 0.0, %v766
        %v768 = vpop.f32.mrb[0].mxu0
        %769 = vmatprep.mubr.bf16.mxu0 0
        %770 = vmatmul.mubr.bf16.gmra.mrb[0].mxu0 %v645
        %v771 = vpop.f32.mrb[0].mxu0
        %v772 = vadd.f32 0.0, %v771
        %v773 = vpop.f32.mrb[0].mxu0
        %v774 = vpop.f32.mrb[0].mxu0
        %v775 = vadd.f32 0.0, %v774
        %v776 = vpop.f32.mrb[0].mxu0
        %777 = vmatprep.mubr.bf16.mxu0 0
        %778 = vmatmul.mubr.bf16.gmra.mrb[0].mxu0 %v648
        %v779 = vpop.f32.mrb[0].mxu0
        %v780 = vadd.f32 0.0, %v779
        %v781 = vpop.f32.mrb[0].mxu0
        %v782 = vpop.f32.mrb[0].mxu0
        %v783 = vadd.f32 0.0, %v782
        %v784 = vpop.f32.mrb[0].mxu0
        %785 = vmatprep.mubr.bf16.mxu0 0
        %786 = vmatmul.mubr.bf16.gmra.mrb[0].mxu0 %v651
        %v787 = vpop.f32.mrb[0].mxu0
        %v788 = vadd.f32 0.0, %v787
        %v789 = vpop.f32.mrb[0].mxu0
        %v790 = vpop.f32.mrb[0].mxu0
        %v791 = vadd.f32 0.0, %v790
        %v792 = vpop.f32.mrb[0].mxu0
        %793 = vmatprep.mubr.bf16.mxu0 0
        %794 = vmatmul.mubr.bf16.gmra.mrb[0].mxu0 %v654
        %v795 = vpop.f32.mrb[0].mxu0
        %v796 = vadd.f32 0.0, %v795
        %v797 = vpop.f32.mrb[0].mxu0
        %v798 = vpop.f32.mrb[0].mxu0
        %v799 = vadd.f32 0.0, %v798
        %v800 = vpop.f32.mrb[0].mxu0
        %801 = vmatprep.mubr.bf16.mxu0 0
        %802 = vmatmul.mubr.bf16.gmra.mrb[0].mxu0 %v657
        %v803 = vpop.f32.mrb[0].mxu0
        %v804 = vadd.f32 0.0, %v803
        %v805 = vpop.f32.mrb[0].mxu0
        %v806 = vpop.f32.mrb[0].mxu0
        %v807 = vadd.f32 0.0, %v806
        %v808 = vpop.f32.mrb[0].mxu0
        %809 = vmatprep.mubr.bf16.mxu0 0
        %810 = vmatmul.mubr.bf16.gmra.mrb[0].mxu0 %v660
        %v811 = vpop.f32.mrb[0].mxu0
        %v812 = vadd.f32 0.0, %v811
        %v813 = vpop.f32.mrb[0].mxu0
        %v814 = vpop.f32.mrb[0].mxu0
        %v815 = vadd.f32 0.0, %v814
        %v816 = vpop.f32.mrb[0].mxu0
        %817 = vmatprep.mubr.bf16.mxu0 0
        %818 = vmatmul.mubr.bf16.gmra.mrb[0].mxu0 %v663
        %v819 = vpop.f32.mrb[0].mxu0
        %v820 = vadd.f32 0.0, %v819
        %v821 = vpop.f32.mrb[0].mxu0
        %v822 = vpop.f32.mrb[0].mxu0
        %v823 = vadd.f32 0.0, %v822
        %v824 = vpop.f32.mrb[0].mxu0
        %825 = vdwg.mxu0
        %v826 = vpack.c.bf16 %v703, %v700
        %v827 = vpack.c.bf16 %v711, %v708
        %v828 = vpack.c.bf16 %v719, %v716
        %v829 = vpack.c.bf16 %v727, %v724
        %v830 = vpack.c.bf16 %v735, %v732
        %v831 = vpack.c.bf16 %v743, %v740
        %v832 = vpack.c.bf16 %v751, %v748
        %v833 = vpack.c.bf16 %v759, %v756
        %v834 = vpack.c.bf16 %v767, %v764
        %v835 = vpack.c.bf16 %v775, %v772
        %v836 = vpack.c.bf16 %v783, %v780
        %v837 = vpack.c.bf16 %v791, %v788
        %v838 = vpack.c.bf16 %v799, %v796
        %v839 = vpack.c.bf16 %v807, %v804
        %v840 = vpack.c.bf16 %v815, %v812
        %v841 = vpack.c.bf16 %v823, %v820
        %v842 = vld [vmem:[%s2] sm:$0xf]
        %v843 = vld [vmem:[%s2 + $0x4] sm:$0xf]
        %v844 = vld [vmem:[%s2 + $0x8] sm:$0xf]
        %v845 = vld [vmem:[%s2 + $0xc] sm:$0xf]
        %v846 = vld [vmem:[%s2 + $0x10] sm:$0xf]
        %v847 = vld [vmem:[%s2 + $0x14] sm:$0xf]
        %v848 = vld [vmem:[%s2 + $0x18] sm:$0xf]
        %v849 = vld [vmem:[%s2 + $0x1c] sm:$0xf]
        %v850 = vld [vmem:[%s2 + $0x20] sm:$0xf]
        %v851 = vld [vmem:[%s2 + $0x24] sm:$0xf]
        %v852 = vld [vmem:[%s2 + $0x28] sm:$0xf]
        %v853 = vld [vmem:[%s2 + $0x2c] sm:$0xf]
        %v854 = vld [vmem:[%s2 + $0x30] sm:$0xf]
        %v855 = vld [vmem:[%s2 + $0x34] sm:$0xf]
        %v856 = vld [vmem:[%s2 + $0x38] sm:$0xf]
        %v857 = vld [vmem:[%s2 + $0x3c] sm:$0xf]
        %v858 = vld [vmem:[%s3] sm:$0x1]
        %v860 = vlaneseq
        %v861 = vshrl.u32 %v860, 7
        %v862 = vsub.s32 0, %v861
        %v863 = vrot.slane %v858, %v862
        %v881 = vunpack.c.l.b16 %v842
        %v882 = vunpack.c.l.b16 %v843
        %v883 = vunpack.c.l.b16 %v844
        %v884 = vunpack.c.l.b16 %v845
        %v885 = vunpack.c.l.b16 %v846
        %v886 = vunpack.c.l.b16 %v847
        %v887 = vunpack.c.l.b16 %v848
        %v888 = vunpack.c.l.b16 %v849
        %v889 = vunpack.c.l.b16 %v850
        %v890 = vunpack.c.l.b16 %v851
        %v891 = vunpack.c.l.b16 %v852
        %v892 = vunpack.c.l.b16 %v853
        %v893 = vunpack.c.l.b16 %v854
        %v894 = vunpack.c.l.b16 %v855
        %v895 = vunpack.c.l.b16 %v856
        %v896 = vunpack.c.l.b16 %v857
        %v897 = vpack.c.b16 %v882, %v881
        %v898 = vpack.c.b16 %v884, %v883
        %v899 = vpack.c.b16 %v886, %v885
        %v900 = vpack.c.b16 %v888, %v887
        %v901 = vpack.c.b16 %v890, %v889
        %v902 = vpack.c.b16 %v892, %v891
        %v903 = vpack.c.b16 %v894, %v893
        %v904 = vpack.c.b16 %v896, %v895
        %913 = vmatprep.subr.bf16.mxu0 0
        %914 = vmatpush1.bf16.msra.mxu0 %v897
        %915 = vmatprep.subr.bf16.mxu0 0
        %916 = vmatpush1.bf16.msra.mxu0 %v898
        %917 = vmatprep.subr.bf16.mxu0 0
        %918 = vmatpush1.bf16.msra.mxu0 %v899
        %919 = vmatprep.subr.bf16.mxu0 0
        %920 = vmatpush1.bf16.msra.mxu0 %v900
        %921 = vmatprep.subr.bf16.mxu0 0
        %922 = vmatpush1.bf16.msra.mxu0 %v901
        %923 = vmatprep.subr.bf16.mxu0 0
        %924 = vmatpush1.bf16.msra.mxu0 %v902
        %925 = vmatprep.subr.bf16.mxu0 0
        %926 = vmatpush1.bf16.msra.mxu0 %v903
        %927 = vmatprep.subr.bf16.mxu0 0
        %928 = vmatpush1.bf16.msra.mxu0 %v904
        %929 = vmatprep.subr.bf16.mxu0 0
        %930 = vmatpush1.bf16.msra.mxu0 0
        %931 = vmatprep.subr.bf16.mxu0 0
        %932 = vmatpush1.bf16.msra.mxu0 0
        %933 = vmatprep.subr.bf16.mxu0 0
        %934 = vmatpush1.bf16.msra.mxu0 0
        %935 = vmatprep.subr.bf16.mxu0 0
        %936 = vmatpush1.bf16.msra.mxu0 0
        %937 = vmatprep.subr.bf16.mxu0 0
        %938 = vmatpush1.bf16.msra.mxu0 0
        %939 = vmatprep.subr.bf16.mxu0 0
        %940 = vmatpush1.bf16.msra.mxu0 0
        %941 = vmatprep.subr.bf16.mxu0 0
        %942 = vmatpush1.bf16.msra.mxu0 0
        %943 = vmatprep.subr.bf16.mxu0 0
        %944 = vmatpush1.bf16.msra.mxu0 0
        %945 = vmatprep.mubr.bf16.mxu0 0
        %946 = vmatmul.mubr.bf16.gmra.mrb[0].mxu0 %v826
        %v947 = vpop.f32.mrb[0].mxu0
        %v948 = vadd.f32 %v863, %v947
        %v949 = vpop.f32.mrb[0].mxu0
        %v950 = vpop.f32.mrb[0].mxu0
        %v951 = vadd.f32 %v863, %v950
        %v952 = vpop.f32.mrb[0].mxu0
        %953 = vmatprep.mubr.bf16.mxu0 0
        %954 = vmatmul.mubr.bf16.gmra.mrb[0].mxu0 %v827
        %v955 = vpop.f32.mrb[0].mxu0
        %v956 = vadd.f32 %v863, %v955
        %v957 = vpop.f32.mrb[0].mxu0
        %v958 = vpop.f32.mrb[0].mxu0
        %v959 = vadd.f32 %v863, %v958
        %v960 = vpop.f32.mrb[0].mxu0
        %961 = vmatprep.mubr.bf16.mxu0 0
        %962 = vmatmul.mubr.bf16.gmra.mrb[0].mxu0 %v828
        %v963 = vpop.f32.mrb[0].mxu0
        %v964 = vadd.f32 %v863, %v963
        %v965 = vpop.f32.mrb[0].mxu0
        %v966 = vpop.f32.mrb[0].mxu0
        %v967 = vadd.f32 %v863, %v966
        %v968 = vpop.f32.mrb[0].mxu0
        %969 = vmatprep.mubr.bf16.mxu0 0
        %970 = vmatmul.mubr.bf16.gmra.mrb[0].mxu0 %v829
        %v971 = vpop.f32.mrb[0].mxu0
        %v972 = vadd.f32 %v863, %v971
        %v973 = vpop.f32.mrb[0].mxu0
        %v974 = vpop.f32.mrb[0].mxu0
        %v975 = vadd.f32 %v863, %v974
        %v976 = vpop.f32.mrb[0].mxu0
        %977 = vmatprep.mubr.bf16.mxu0 0
        %978 = vmatmul.mubr.bf16.gmra.mrb[0].mxu0 %v830
        %v979 = vpop.f32.mrb[0].mxu0
        %v980 = vadd.f32 %v863, %v979
        %v981 = vpop.f32.mrb[0].mxu0
        %v982 = vpop.f32.mrb[0].mxu0
        %v983 = vadd.f32 %v863, %v982
        %v984 = vpop.f32.mrb[0].mxu0
        %985 = vmatprep.mubr.bf16.mxu0 0
        %986 = vmatmul.mubr.bf16.gmra.mrb[0].mxu0 %v831
        %v987 = vpop.f32.mrb[0].mxu0
        %v988 = vadd.f32 %v863, %v987
        %v989 = vpop.f32.mrb[0].mxu0
        %v990 = vpop.f32.mrb[0].mxu0
        %v991 = vadd.f32 %v863, %v990
        %v992 = vpop.f32.mrb[0].mxu0
        %993 = vmatprep.mubr.bf16.mxu0 0
        %994 = vmatmul.mubr.bf16.gmra.mrb[0].mxu0 %v832
        %v995 = vpop.f32.mrb[0].mxu0
        %v996 = vadd.f32 %v863, %v995
        %v997 = vpop.f32.mrb[0].mxu0
        %v998 = vpop.f32.mrb[0].mxu0
        %v999 = vadd.f32 %v863, %v998
        %v1000 = vpop.f32.mrb[0].mxu0
        %1001 = vmatprep.mubr.bf16.mxu0 0
        %1002 = vmatmul.mubr.bf16.gmra.mrb[0].mxu0 %v833
        %v1003 = vpop.f32.mrb[0].mxu0
        %v1004 = vadd.f32 %v863, %v1003
        %v1005 = vpop.f32.mrb[0].mxu0
        %v1006 = vpop.f32.mrb[0].mxu0
        %v1007 = vadd.f32 %v863, %v1006
        %v1008 = vpop.f32.mrb[0].mxu0
        %1009 = vmatprep.mubr.bf16.mxu0 0
        %1010 = vmatmul.mubr.bf16.gmra.mrb[0].mxu0 %v834
        %v1011 = vpop.f32.mrb[0].mxu0
        %v1012 = vadd.f32 %v863, %v1011
        %v1013 = vpop.f32.mrb[0].mxu0
        %v1014 = vpop.f32.mrb[0].mxu0
        %v1015 = vadd.f32 %v863, %v1014
        %v1016 = vpop.f32.mrb[0].mxu0
        %1017 = vmatprep.mubr.bf16.mxu0 0
        %1018 = vmatmul.mubr.bf16.gmra.mrb[0].mxu0 %v835
        %v1019 = vpop.f32.mrb[0].mxu0
        %v1020 = vadd.f32 %v863, %v1019
        %v1021 = vpop.f32.mrb[0].mxu0
        %v1022 = vpop.f32.mrb[0].mxu0
        %v1023 = vadd.f32 %v863, %v1022
        %v1024 = vpop.f32.mrb[0].mxu0
        %1025 = vmatprep.mubr.bf16.mxu0 0
        %1026 = vmatmul.mubr.bf16.gmra.mrb[0].mxu0 %v836
        %v1027 = vpop.f32.mrb[0].mxu0
        %v1028 = vadd.f32 %v863, %v1027
        %v1029 = vpop.f32.mrb[0].mxu0
        %v1030 = vpop.f32.mrb[0].mxu0
        %v1031 = vadd.f32 %v863, %v1030
        %v1032 = vpop.f32.mrb[0].mxu0
        %1033 = vmatprep.mubr.bf16.mxu0 0
        %1034 = vmatmul.mubr.bf16.gmra.mrb[0].mxu0 %v837
        %v1035 = vpop.f32.mrb[0].mxu0
        %v1036 = vadd.f32 %v863, %v1035
        %v1037 = vpop.f32.mrb[0].mxu0
        %v1038 = vpop.f32.mrb[0].mxu0
        %v1039 = vadd.f32 %v863, %v1038
        %v1040 = vpop.f32.mrb[0].mxu0
        %1041 = vmatprep.mubr.bf16.mxu0 0
        %1042 = vmatmul.mubr.bf16.gmra.mrb[0].mxu0 %v838
        %v1043 = vpop.f32.mrb[0].mxu0
        %v1044 = vadd.f32 %v863, %v1043
        %v1045 = vpop.f32.mrb[0].mxu0
        %v1046 = vpop.f32.mrb[0].mxu0
        %v1047 = vadd.f32 %v863, %v1046
        %v1048 = vpop.f32.mrb[0].mxu0
        %1049 = vmatprep.mubr.bf16.mxu0 0
        %1050 = vmatmul.mubr.bf16.gmra.mrb[0].mxu0 %v839
        %v1051 = vpop.f32.mrb[0].mxu0
        %v1052 = vadd.f32 %v863, %v1051
        %v1053 = vpop.f32.mrb[0].mxu0
        %v1054 = vpop.f32.mrb[0].mxu0
        %v1055 = vadd.f32 %v863, %v1054
        %v1056 = vpop.f32.mrb[0].mxu0
        %1057 = vmatprep.mubr.bf16.mxu0 0
        %1058 = vmatmul.mubr.bf16.gmra.mrb[0].mxu0 %v840
        %v1059 = vpop.f32.mrb[0].mxu0
        %v1060 = vadd.f32 %v863, %v1059
        %v1061 = vpop.f32.mrb[0].mxu0
        %v1062 = vpop.f32.mrb[0].mxu0
        %v1063 = vadd.f32 %v863, %v1062
        %v1064 = vpop.f32.mrb[0].mxu0
        %1065 = vmatprep.mubr.bf16.mxu0 0
        %1066 = vmatmul.mubr.bf16.gmra.mrb[0].mxu0 %v841
        %v1067 = vpop.f32.mrb[0].mxu0
        %v1068 = vadd.f32 %v863, %v1067
        %v1069 = vpop.f32.mrb[0].mxu0
        %v1070 = vpop.f32.mrb[0].mxu0
        %v1071 = vadd.f32 %v863, %v1070
        %v1072 = vpop.f32.mrb[0].mxu0
        %1073 = vdwg.mxu0
        %v1074 = vtanh.pop %v948
        %v1075 = vtanh.pop %v951
        %v1076 = vtanh.pop %v956
        %v1077 = vtanh.pop %v959
        %v1078 = vtanh.pop %v964
        %v1079 = vtanh.pop %v967
        %v1080 = vtanh.pop %v972
        %v1081 = vtanh.pop %v975
        %v1082 = vtanh.pop %v980
        %v1083 = vtanh.pop %v983
        %v1084 = vtanh.pop %v988
        %v1085 = vtanh.pop %v991
        %v1086 = vtanh.pop %v996
        %v1087 = vtanh.pop %v999
        %v1088 = vtanh.pop %v1004
        %v1089 = vtanh.pop %v1007
        %v1090 = vtanh.pop %v1012
        %v1091 = vtanh.pop %v1015
        %v1092 = vtanh.pop %v1020
        %v1093 = vtanh.pop %v1023
        %v1094 = vtanh.pop %v1028
        %v1095 = vtanh.pop %v1031
        %v1096 = vtanh.pop %v1036
        %v1097 = vtanh.pop %v1039
        %v1098 = vtanh.pop %v1044
        %v1099 = vtanh.pop %v1047
        %v1100 = vtanh.pop %v1052
        %v1101 = vtanh.pop %v1055
        %v1102 = vtanh.pop %v1060
        %v1103 = vtanh.pop %v1063
        %v1104 = vtanh.pop %v1068
        %v1105 = vtanh.pop %v1071
        %v1106 = vrot.slane %v1074, 4
        %v1107 = vadd.f32 %v1074, %v1106
        %v1108 = vrot.slane %v1107, 2
        %v1109 = vadd.f32 %v1107, %v1108
        %v1110 = vrot.slane %v1109, 1
        %v1111 = vadd.f32 %v1109, %v1110
        %v1112 = vrot.slane %v1075, 4
        %v1113 = vadd.f32 %v1075, %v1112
        %v1114 = vrot.slane %v1113, 2
        %v1115 = vadd.f32 %v1113, %v1114
        %v1116 = vrot.slane %v1115, 1
        %v1117 = vadd.f32 %v1115, %v1116
        %v1118 = vrot.slane %v1076, 4
        %v1119 = vadd.f32 %v1076, %v1118
        %v1120 = vrot.slane %v1119, 2
        %v1121 = vadd.f32 %v1119, %v1120
        %v1122 = vrot.slane %v1121, 1
        %v1123 = vadd.f32 %v1121, %v1122
        %v1124 = vrot.slane %v1077, 4
        %v1125 = vadd.f32 %v1077, %v1124
        %v1126 = vrot.slane %v1125, 2
        %v1127 = vadd.f32 %v1125, %v1126
        %v1128 = vrot.slane %v1127, 1
        %v1129 = vadd.f32 %v1127, %v1128
        %v1130 = vrot.slane %v1078, 4
        %v1131 = vadd.f32 %v1078, %v1130
        %v1132 = vrot.slane %v1131, 2
        %v1133 = vadd.f32 %v1131, %v1132
        %v1134 = vrot.slane %v1133, 1
        %v1135 = vadd.f32 %v1133, %v1134
        %v1136 = vrot.slane %v1079, 4
        %v1137 = vadd.f32 %v1079, %v1136
        %v1138 = vrot.slane %v1137, 2
        %v1139 = vadd.f32 %v1137, %v1138
        %v1140 = vrot.slane %v1139, 1
        %v1141 = vadd.f32 %v1139, %v1140
        %v1142 = vrot.slane %v1080, 4
        %v1143 = vadd.f32 %v1080, %v1142
        %v1144 = vrot.slane %v1143, 2
        %v1145 = vadd.f32 %v1143, %v1144
        %v1146 = vrot.slane %v1145, 1
        %v1147 = vadd.f32 %v1145, %v1146
        %v1148 = vrot.slane %v1081, 4
        %v1149 = vadd.f32 %v1081, %v1148
        %v1150 = vrot.slane %v1149, 2
        %v1151 = vadd.f32 %v1149, %v1150
        %v1152 = vrot.slane %v1151, 1
        %v1153 = vadd.f32 %v1151, %v1152
        %v1154 = vrot.slane %v1082, 4
        %v1155 = vadd.f32 %v1082, %v1154
        %v1156 = vrot.slane %v1155, 2
        %v1157 = vadd.f32 %v1155, %v1156
        %v1158 = vrot.slane %v1157, 1
        %v1159 = vadd.f32 %v1157, %v1158
        %v1160 = vrot.slane %v1083, 4
        %v1161 = vadd.f32 %v1083, %v1160
        %v1162 = vrot.slane %v1161, 2
        %v1163 = vadd.f32 %v1161, %v1162
        %v1164 = vrot.slane %v1163, 1
        %v1165 = vadd.f32 %v1163, %v1164
        %v1166 = vrot.slane %v1084, 4
        %v1167 = vadd.f32 %v1084, %v1166
        %v1168 = vrot.slane %v1167, 2
        %v1169 = vadd.f32 %v1167, %v1168
        %v1170 = vrot.slane %v1169, 1
        %v1171 = vadd.f32 %v1169, %v1170
        %v1172 = vrot.slane %v1085, 4
        %v1173 = vadd.f32 %v1085, %v1172
        %v1174 = vrot.slane %v1173, 2
        %v1175 = vadd.f32 %v1173, %v1174
        %v1176 = vrot.slane %v1175, 1
        %v1177 = vadd.f32 %v1175, %v1176
        %v1178 = vrot.slane %v1086, 4
        %v1179 = vadd.f32 %v1086, %v1178
        %v1180 = vrot.slane %v1179, 2
        %v1181 = vadd.f32 %v1179, %v1180
        %v1182 = vrot.slane %v1181, 1
        %v1183 = vadd.f32 %v1181, %v1182
        %v1184 = vrot.slane %v1087, 4
        %v1185 = vadd.f32 %v1087, %v1184
        %v1186 = vrot.slane %v1185, 2
        %v1187 = vadd.f32 %v1185, %v1186
        %v1188 = vrot.slane %v1187, 1
        %v1189 = vadd.f32 %v1187, %v1188
        %v1190 = vrot.slane %v1088, 4
        %v1191 = vadd.f32 %v1088, %v1190
        %v1192 = vrot.slane %v1191, 2
        %v1193 = vadd.f32 %v1191, %v1192
        %v1194 = vrot.slane %v1193, 1
        %v1195 = vadd.f32 %v1193, %v1194
        %v1196 = vrot.slane %v1089, 4
        %v1197 = vadd.f32 %v1089, %v1196
        %v1198 = vrot.slane %v1197, 2
        %v1199 = vadd.f32 %v1197, %v1198
        %v1200 = vrot.slane %v1199, 1
        %v1201 = vadd.f32 %v1199, %v1200
        %v1202 = vrot.slane %v1090, 4
        %v1203 = vadd.f32 %v1090, %v1202
        %v1204 = vrot.slane %v1203, 2
        %v1205 = vadd.f32 %v1203, %v1204
        %v1206 = vrot.slane %v1205, 1
        %v1207 = vadd.f32 %v1205, %v1206
        %v1208 = vrot.slane %v1091, 4
        %v1209 = vadd.f32 %v1091, %v1208
        %v1210 = vrot.slane %v1209, 2
        %v1211 = vadd.f32 %v1209, %v1210
        %v1212 = vrot.slane %v1211, 1
        %v1213 = vadd.f32 %v1211, %v1212
        %v1214 = vrot.slane %v1092, 4
        %v1215 = vadd.f32 %v1092, %v1214
        %v1216 = vrot.slane %v1215, 2
        %v1217 = vadd.f32 %v1215, %v1216
        %v1218 = vrot.slane %v1217, 1
        %v1219 = vadd.f32 %v1217, %v1218
        %v1220 = vrot.slane %v1093, 4
        %v1221 = vadd.f32 %v1093, %v1220
        %v1222 = vrot.slane %v1221, 2
        %v1223 = vadd.f32 %v1221, %v1222
        %v1224 = vrot.slane %v1223, 1
        %v1225 = vadd.f32 %v1223, %v1224
        %v1226 = vrot.slane %v1094, 4
        %v1227 = vadd.f32 %v1094, %v1226
        %v1228 = vrot.slane %v1227, 2
        %v1229 = vadd.f32 %v1227, %v1228
        %v1230 = vrot.slane %v1229, 1
        %v1231 = vadd.f32 %v1229, %v1230
        %v1232 = vrot.slane %v1095, 4
        %v1233 = vadd.f32 %v1095, %v1232
        %v1234 = vrot.slane %v1233, 2
        %v1235 = vadd.f32 %v1233, %v1234
        %v1236 = vrot.slane %v1235, 1
        %v1237 = vadd.f32 %v1235, %v1236
        %v1238 = vrot.slane %v1096, 4
        %v1239 = vadd.f32 %v1096, %v1238
        %v1240 = vrot.slane %v1239, 2
        %v1241 = vadd.f32 %v1239, %v1240
        %v1242 = vrot.slane %v1241, 1
        %v1243 = vadd.f32 %v1241, %v1242
        %v1244 = vrot.slane %v1097, 4
        %v1245 = vadd.f32 %v1097, %v1244
        %v1246 = vrot.slane %v1245, 2
        %v1247 = vadd.f32 %v1245, %v1246
        %v1248 = vrot.slane %v1247, 1
        %v1249 = vadd.f32 %v1247, %v1248
        %v1250 = vrot.slane %v1098, 4
        %v1251 = vadd.f32 %v1098, %v1250
        %v1252 = vrot.slane %v1251, 2
        %v1253 = vadd.f32 %v1251, %v1252
        %v1254 = vrot.slane %v1253, 1
        %v1255 = vadd.f32 %v1253, %v1254
        %v1256 = vrot.slane %v1099, 4
        %v1257 = vadd.f32 %v1099, %v1256
        %v1258 = vrot.slane %v1257, 2
        %v1259 = vadd.f32 %v1257, %v1258
        %v1260 = vrot.slane %v1259, 1
        %v1261 = vadd.f32 %v1259, %v1260
        %v1262 = vrot.slane %v1100, 4
        %v1263 = vadd.f32 %v1100, %v1262
        %v1264 = vrot.slane %v1263, 2
        %v1265 = vadd.f32 %v1263, %v1264
        %v1266 = vrot.slane %v1265, 1
        %v1267 = vadd.f32 %v1265, %v1266
        %v1268 = vrot.slane %v1101, 4
        %v1269 = vadd.f32 %v1101, %v1268
        %v1270 = vrot.slane %v1269, 2
        %v1271 = vadd.f32 %v1269, %v1270
        %v1272 = vrot.slane %v1271, 1
        %v1273 = vadd.f32 %v1271, %v1272
        %v1274 = vrot.slane %v1102, 4
        %v1275 = vadd.f32 %v1102, %v1274
        %v1276 = vrot.slane %v1275, 2
        %v1277 = vadd.f32 %v1275, %v1276
        %v1278 = vrot.slane %v1277, 1
        %v1279 = vadd.f32 %v1277, %v1278
        %v1280 = vrot.slane %v1103, 4
        %v1281 = vadd.f32 %v1103, %v1280
        %v1282 = vrot.slane %v1281, 2
        %v1283 = vadd.f32 %v1281, %v1282
        %v1284 = vrot.slane %v1283, 1
        %v1285 = vadd.f32 %v1283, %v1284
        %v1286 = vrot.slane %v1104, 4
        %v1287 = vadd.f32 %v1104, %v1286
        %v1288 = vrot.slane %v1287, 2
        %v1289 = vadd.f32 %v1287, %v1288
        %v1290 = vrot.slane %v1289, 1
        %v1291 = vadd.f32 %v1289, %v1290
        %v1292 = vrot.slane %v1105, 4
        %v1293 = vadd.f32 %v1105, %v1292
        %v1294 = vrot.slane %v1293, 2
        %v1295 = vadd.f32 %v1293, %v1294
        %v1296 = vrot.slane %v1295, 1
        %v1297 = vadd.f32 %v1295, %v1296
        %v1298 = vrcp.pop 8.0
        %v1299 = vmul.f32 %v1111, %v1298
        %v1300 = vmul.f32 %v1117, %v1298
        %v1301 = vmul.f32 %v1123, %v1298
        %v1302 = vmul.f32 %v1129, %v1298
        %v1303 = vmul.f32 %v1135, %v1298
        %v1304 = vmul.f32 %v1141, %v1298
        %v1305 = vmul.f32 %v1147, %v1298
        %v1306 = vmul.f32 %v1153, %v1298
        %v1307 = vmul.f32 %v1159, %v1298
        %v1308 = vmul.f32 %v1165, %v1298
        %v1309 = vmul.f32 %v1171, %v1298
        %v1310 = vmul.f32 %v1177, %v1298
        %v1311 = vmul.f32 %v1183, %v1298
        %v1312 = vmul.f32 %v1189, %v1298
        %v1313 = vmul.f32 %v1195, %v1298
        %v1314 = vmul.f32 %v1201, %v1298
        %v1315 = vmul.f32 %v1207, %v1298
        %v1316 = vmul.f32 %v1213, %v1298
        %v1317 = vmul.f32 %v1219, %v1298
        %v1318 = vmul.f32 %v1225, %v1298
        %v1319 = vmul.f32 %v1231, %v1298
        %v1320 = vmul.f32 %v1237, %v1298
        %v1321 = vmul.f32 %v1243, %v1298
        %v1322 = vmul.f32 %v1249, %v1298
        %v1323 = vmul.f32 %v1255, %v1298
        %v1324 = vmul.f32 %v1261, %v1298
        %v1325 = vmul.f32 %v1267, %v1298
        %v1326 = vmul.f32 %v1273, %v1298
        %v1327 = vmul.f32 %v1279, %v1298
        %v1328 = vmul.f32 %v1285, %v1298
        %v1329 = vmul.f32 %v1291, %v1298
        %v1330 = vmul.f32 %v1297, %v1298
        %vm1363 = vcmask 1041409
        %v1364 = vsel %vm1363, %v1300, %v1299
        %vm1365 = vcmask 1042434
        %v1366 = vsel %vm1365, %v1301, %v1364
        %vm1367 = vcmask 1043459
        %v1368 = vsel %vm1367, %v1302, %v1366
        %vm1369 = vcmask 1044484
        %v1370 = vsel %vm1369, %v1303, %v1368
        %vm1371 = vcmask 1045509
        %v1372 = vsel %vm1371, %v1304, %v1370
        %vm1373 = vcmask 1046534
        %v1374 = vsel %vm1373, %v1305, %v1372
        %vm1375 = vcmask 1047559
        %v1376 = vsel %vm1375, %v1306, %v1374
        %v1377 = vsel %vm1363, %v1308, %v1307
        %v1378 = vsel %vm1365, %v1309, %v1377
        %v1379 = vsel %vm1367, %v1310, %v1378
        %v1380 = vsel %vm1369, %v1311, %v1379
        %v1381 = vsel %vm1371, %v1312, %v1380
        %v1382 = vsel %vm1373, %v1313, %v1381
        %v1383 = vsel %vm1375, %v1314, %v1382
        %v1384 = vsel %vm1363, %v1316, %v1315
        %v1385 = vsel %vm1365, %v1317, %v1384
        %v1386 = vsel %vm1367, %v1318, %v1385
        %v1387 = vsel %vm1369, %v1319, %v1386
        %v1388 = vsel %vm1371, %v1320, %v1387
        %v1389 = vsel %vm1373, %v1321, %v1388
        %v1390 = vsel %vm1375, %v1322, %v1389
        %v1391 = vsel %vm1363, %v1324, %v1323
        %v1392 = vsel %vm1365, %v1325, %v1391
        %v1393 = vsel %vm1367, %v1326, %v1392
        %v1394 = vsel %vm1369, %v1327, %v1393
        %v1395 = vsel %vm1371, %v1328, %v1394
        %v1396 = vsel %vm1373, %v1329, %v1395
        %v1397 = vsel %vm1375, %v1330, %v1396
        %1402 = vst [vmem:[%s326] sm:$0xff] %v1376
        %1403 = vst [vmem:[%s326 + $0x8] sm:$0xff] %v1383
        %1404 = vst [vmem:[%s326 + $0x10] sm:$0xff] %v1390
        %1405 = vst [vmem:[%s326 + $0x18] sm:$0xff] %v1397
        %v1406 = vld [vmem:[%s4] sm:$0xff]
        %v1407 = vld [vmem:[%s4 + $0x8] sm:$0xff]
        %v1408 = vld [vmem:[%s4 + $0x10] sm:$0xff]
        %v1409 = vld [vmem:[%s4 + $0x18] sm:$0xff]
        %v1410 = vld [vmem:[%s4 + $0x20] sm:$0xff]
        %v1411 = vld [vmem:[%s4 + $0x28] sm:$0xff]
        %v1412 = vld [vmem:[%s4 + $0x30] sm:$0xff]
        %v1413 = vld [vmem:[%s4 + $0x38] sm:$0xff]
        %v1414 = vld [vmem:[%s4 + $0x40] sm:$0xff]
        %v1415 = vld [vmem:[%s4 + $0x48] sm:$0xff]
        %v1416 = vld [vmem:[%s4 + $0x50] sm:$0xff]
        %v1417 = vld [vmem:[%s4 + $0x58] sm:$0xff]
        %v1418 = vld [vmem:[%s4 + $0x60] sm:$0xff]
        %v1419 = vld [vmem:[%s4 + $0x68] sm:$0xff]
        %v1420 = vld [vmem:[%s4 + $0x70] sm:$0xff]
        %v1421 = vld [vmem:[%s4 + $0x78] sm:$0xff]
        %v1422 = vld [vmem:[%s5] sm:$0x1]
        %v1424 = vlaneseq
        %v1425 = vshrl.u32 %v1424, 7
        %v1426 = vsub.s32 0, %v1425
        %v1427 = vrot.slane %v1422, %v1426
        %1429 = vmatprep.subr.mxu0 0.0
        %1430 = vmatpush1.msra.mxu0 %v1406
        %1431 = vmatprep.subr.mxu0 0.0
        %1432 = vmatpush1.msra.mxu0 %v1407
        %1433 = vmatprep.subr.mxu0 0.0
        %1434 = vmatpush1.msra.mxu0 %v1408
        %1435 = vmatprep.subr.mxu0 0.0
        %1436 = vmatpush1.msra.mxu0 %v1409
        %1437 = vmatprep.subr.mxu0 0.0
        %1438 = vmatpush1.msra.mxu0 %v1410
        %1439 = vmatprep.subr.mxu0 0.0
        %1440 = vmatpush1.msra.mxu0 %v1411
        %1441 = vmatprep.subr.mxu0 0.0
        %1442 = vmatpush1.msra.mxu0 %v1412
        %1443 = vmatprep.subr.mxu0 0.0
        %1444 = vmatpush1.msra.mxu0 %v1413
        %1445 = vmatprep.subr.mxu0 0.0
        %1446 = vmatpush1.msra.mxu0 %v1414
        %1447 = vmatprep.subr.mxu0 0.0
        %1448 = vmatpush1.msra.mxu0 %v1415
        %1449 = vmatprep.subr.mxu0 0.0
        %1450 = vmatpush1.msra.mxu0 %v1416
        %1451 = vmatprep.subr.mxu0 0.0
        %1452 = vmatpush1.msra.mxu0 %v1417
        %1453 = vmatprep.subr.mxu0 0.0
        %1454 = vmatpush1.msra.mxu0 %v1418
        %1455 = vmatprep.subr.mxu0 0.0
        %1456 = vmatpush1.msra.mxu0 %v1419
        %1457 = vmatprep.subr.mxu0 0.0
        %1458 = vmatpush1.msra.mxu0 %v1420
        %1459 = vmatprep.subr.mxu0 0.0
        %1460 = vmatpush1.msra.mxu0 %v1421
        %1461 = vmatprep.subr.mxu0 0.0
        %1462 = vmatpush1.msra.mxu0 0.0
        %1463 = vmatprep.subr.mxu0 0.0
        %1464 = vmatpush1.msra.mxu0 0.0
        %1465 = vmatprep.subr.mxu0 0.0
        %1466 = vmatpush1.msra.mxu0 0.0
        %1467 = vmatprep.subr.mxu0 0.0
        %1468 = vmatpush1.msra.mxu0 0.0
        %1469 = vmatprep.subr.mxu0 0.0
        %1470 = vmatpush1.msra.mxu0 0.0
        %1471 = vmatprep.subr.mxu0 0.0
        %1472 = vmatpush1.msra.mxu0 0.0
        %1473 = vmatprep.subr.mxu0 0.0
        %1474 = vmatpush1.msra.mxu0 0.0
        %1475 = vmatprep.subr.mxu0 0.0
        %1476 = vmatpush1.msra.mxu0 0.0
        %1477 = vmatprep.subr.mxu0 0.0
        %1478 = vmatpush1.msra.mxu0 0.0
        %1479 = vmatprep.subr.mxu0 0.0
        %1480 = vmatpush1.msra.mxu0 0.0
        %1481 = vmatprep.subr.mxu0 0.0
        %1482 = vmatpush1.msra.mxu0 0.0
        %1483 = vmatprep.subr.mxu0 0.0
        %1484 = vmatpush1.msra.mxu0 0.0
        %1485 = vmatprep.subr.mxu0 0.0
        %1486 = vmatpush1.msra.mxu0 0.0
        %1487 = vmatprep.subr.mxu0 0.0
        %1488 = vmatpush1.msra.mxu0 0.0
        %1489 = vmatprep.subr.mxu0 0.0
        %1490 = vmatpush1.msra.mxu0 0.0
        %1491 = vmatprep.subr.mxu0 0.0
        %1492 = vmatpush1.msra.mxu0 0.0
        %1493 = vmatprep.mubr.f32.mxu0 0.0
        %1494 = vmatmul.mubr.f32.gmra.mrb[0].mxu0 %v1376
        %v1495 = vpop.f32.mrb[0].mxu0
        %v1496 = vadd.f32 %v1427, %v1495
        %v1497 = vpop.f32.mrb[0].mxu0
        %1498 = vmatprep.mubr.f32.mxu0 0.0
        %1499 = vmatmul.mubr.f32.gmra.mrb[0].mxu0 %v1383
        %v1500 = vpop.f32.mrb[0].mxu0
        %v1501 = vadd.f32 %v1427, %v1500
        %v1502 = vpop.f32.mrb[0].mxu0
        %1503 = vmatprep.mubr.f32.mxu0 0.0
        %1504 = vmatmul.mubr.f32.gmra.mrb[0].mxu0 %v1390
        %v1505 = vpop.f32.mrb[0].mxu0
        %v1506 = vadd.f32 %v1427, %v1505
        %v1507 = vpop.f32.mrb[0].mxu0
        %1508 = vmatprep.mubr.f32.mxu0 0.0
        %1509 = vmatmul.mubr.f32.gmra.mrb[0].mxu0 %v1397
        %v1510 = vpop.f32.mrb[0].mxu0
        %v1511 = vadd.f32 %v1427, %v1510
        %v1512 = vpop.f32.mrb[0].mxu0
        %1513 = vdwg.mxu0
        %1514 = vmax.xlane.f32.xlu0 %v1496
        %v1515 = vpop.xlane.xlu0 %1514
        %1516 = vmax.xlane.f32.xlu0 %v1501
        %v1517 = vpop.xlane.xlu0 %1516
        %1518 = vmax.xlane.f32.xlu0 %v1506
        %v1519 = vpop.xlane.xlu0 %1518
        %1520 = vmax.xlane.f32.xlu0 %v1511
        %v1521 = vpop.xlane.xlu0 %1520
        %v1522 = vsub.f32 %v1496, %v1515
        %v1523 = vsub.f32 %v1501, %v1517
        %v1524 = vsub.f32 %v1506, %v1519
        %v1525 = vsub.f32 %v1511, %v1521
        %v1526 = vmul.f32 %v1522, 1.442695
        %v1527 = vpow.pop %v1526
        %v1528 = vmul.f32 %v1523, 1.442695
        %v1529 = vpow.pop %v1528
        %v1530 = vmul.f32 %v1524, 1.442695
        %v1531 = vpow.pop %v1530
        %v1532 = vmul.f32 %v1525, 1.442695
        %v1533 = vpow.pop %v1532
        %1534 = vadd.xlane.f32.xlu0 %v1527
        %v1535 = vpop.xlane.xlu0 %1534
        %1536 = vadd.xlane.f32.xlu0 %v1529
        %v1537 = vpop.xlane.xlu0 %1536
        %1538 = vadd.xlane.f32.xlu0 %v1531
        %v1539 = vpop.xlane.xlu0 %1538
        %1540 = vadd.xlane.f32.xlu0 %v1533
        %v1541 = vpop.xlane.xlu0 %1540
        %v1542 = vlog2.pop %v1535
        %v1543 = vmul.f32 %v1542, 0.6931472
        %v1544 = vlog2.pop %v1537
        %v1545 = vmul.f32 %v1544, 0.6931472
        %v1546 = vlog2.pop %v1539
        %v1547 = vmul.f32 %v1546, 0.6931472
        %v1548 = vlog2.pop %v1541
        %v1549 = vmul.f32 %v1548, 0.6931472
        %v1550 = vsub.f32 %v1522, %v1543
        %v1551 = vsub.f32 %v1523, %v1545
        %v1552 = vsub.f32 %v1524, %v1547
        %v1553 = vsub.f32 %v1525, %v1549
        %v1554 = vld [vmem:[%s337] sm:$0xff]
        %v1555 = vld [vmem:[%s337 + $0x8] sm:$0xff]
        %v1556 = vld [vmem:[%s337 + $0x10] sm:$0xff]
        %v1557 = vld [vmem:[%s337 + $0x18] sm:$0xff]
        %1558 = vset.pattern.permute.xlu0 0
        %1559 = vperm.xlu0 %1558, %v1554
        %v1560 = vpop.permute.xlu0 %1559
        %1561 = vset.pattern.permute.xlu0 0
        %1562 = vperm.xlu0 %1561, %v1555
        %v1563 = vpop.permute.xlu0 %1562
        %1564 = vset.pattern.permute.xlu0 0
        %1565 = vperm.xlu0 %1564, %v1556
        %v1566 = vpop.permute.xlu0 %1565
        %1567 = vset.pattern.permute.xlu0 0
        %1568 = vperm.xlu0 %1567, %v1557
        %v1569 = vpop.permute.xlu0 %1568
        %vm1570 = vcmp.eq.s32.totalorder %v375, %v1560
        %vm1571 = vcmp.eq.s32.totalorder %v375, %v1563
        %vm1572 = vcmp.eq.s32.totalorder %v375, %v1566
        %vm1573 = vcmp.eq.s32.totalorder %v375, %v1569
        %v1574 = vsel %vm1570, %v1550, 0.0
        %v1575 = vsel %vm1571, %v1551, 0.0
        %v1576 = vsel %vm1572, %v1552, 0.0
        %v1577 = vsel %vm1573, %v1553, 0.0
        %1578 = vadd.xlane.f32.xlu0 %v1574
        %v1579 = vpop.xlane.xlu0 %1578
        %1580 = vadd.xlane.f32.xlu0 %v1575
        %v1581 = vpop.xlane.xlu0 %1580
        %1582 = vadd.xlane.f32.xlu0 %v1576
        %v1583 = vpop.xlane.xlu0 %1582
        %1584 = vadd.xlane.f32.xlu0 %v1577
        %v1585 = vpop.xlane.xlu0 %1584
        %vm1586 = vcmp.eq.s32.totalorder %v375, 127
        %v1587 = vsub.f32 0.0, %v1579
        %v1588 = vsub.f32 0.0, %v1581
        %v1589 = vsub.f32 0.0, %v1583
        %v1590 = vsub.f32 0.0, %v1585
        %v1591 = vsel %vm1586, %v1587, %v1496
        %v1592 = vsel %vm1586, %v1588, %v1501
        %v1593 = vsel %vm1586, %v1589, %v1506
        %v1594 = vsel %vm1586, %v1590, %v1511
        %1595 = vst [vmem:[%s319] sm:$0xff] %v1591
        %1596 = vst [vmem:[%s319 + $0x8] sm:$0xff] %v1592
        %1597 = vst [vmem:[%s319 + $0x10] sm:$0xff] %v1593
        %1598 = vst [vmem:[%s319 + $0x18] sm:$0xff] %v1594
        %s1599 = sand.u32 %s191, 1
        %s1600 = scalar_lea.sflag [#allocation3], %s1599
        %s1601 = sand.u32 %s191, 1
        %s1602 = smul.addr %s1601, 32
        %s1603 = scalar_lea.vmem [#allocation2], %s1602
        %s1604 = sand.u32 %s217, 1
        %s1605 = scalar_lea.sflag [#allocation5], %s1604
        %s1606 = sand.u32 %s217, 1
        %s1607 = smul.addr %s1606, 32
        %s1608 = scalar_lea.vmem [#allocation4], %s1607
        // Predicated region
        $region49: #{tpu_custom_call.1} parent=47 // pred_check
          %p1609 = pneg %p201
        $region50: #{tpu_custom_call.1} parent=47 // pred_check_branch
          %1611 = sbr.rel (%p1609) target = $region52
        $region51: #{tpu_custom_call.1} parent=47 // pred_region
          %s1612 = smul.u32 4, %s26
          %s1614 = ssub.s32 512, 512
          %1615 = vsyncadd %s1600, %s1614
          %s1616 = smul.addr %s1612, 128
          %s1617 = scalar_lea.hbm %s7, %s1616
          %s1618 = sshll.u32 %s1603, 4
          %s1619 = int_to_ptr.vmem [resolvable:$true] %s1618
          %1624 = dma.vmem_to_hbm [thread:$0]  %s1619, 512, %s1617, %s1600, 128, 128, 8
        $region52: #{tpu_custom_call.1} parent=47 // pred_fallthru
          _
        // Predicated region
        $region53: #{tpu_custom_call.1} parent=47 // pred_check
          %p1625 = pneg %p227
        $region54: #{tpu_custom_call.1} parent=47 // pred_check_branch
          %1627 = sbr.rel (%p1625) target = $region56
        $region55: #{tpu_custom_call.1} parent=47 // pred_region
          %s1628 = smul.u32 4, %s26
          %s1630 = ssub.s32 512, 512
          %1631 = vsyncadd %s1605, %s1630
          %s1632 = smul.addr %s1628, 128
          %s1633 = scalar_lea.hbm %s8, %s1632
          %s1634 = sshll.u32 %s1608, 4
          %s1635 = int_to_ptr.vmem [resolvable:$true] %s1634
          %1640 = dma.vmem_to_hbm [thread:$0]  %s1635, 512, %s1633, %s1605, 128, 128, 8
        $region56: #{tpu_custom_call.1} parent=47 // pred_fallthru
          _
      $region48: #{tpu_custom_call.1} parent=5 // pred_fallthru
        _
      %p1641 = scmp.le.s32.totalorder 2, %s21
      // Predicated region
      $region57: #{tpu_custom_call.1} parent=5 // pred_check
        %p1642 = pneg %p1641
      $region58: #{tpu_custom_call.1} parent=5 // pred_check_branch
        %1644 = sbr.rel (%p1642) target = $region60
      $region59: #{tpu_custom_call.1} parent=5 // pred_region
        %s1645 = ssub.s32 %s21, 2
        // Predicated region
        $region61: #{tpu_custom_call.1} parent=59 // pred_check
          %p1646 = pneg %p207
        $region62: #{tpu_custom_call.1} parent=59 // pred_check_branch
          %1648 = sbr.rel (%p1646) target = $region64
        $region63: #{tpu_custom_call.1} parent=59 // pred_region
          %s1649 = sand.u32 %s192, 1
          %s1650 = scalar_lea.sflag [#allocation3], %s1649
          %s1651 = sand.u32 %s192, 1
          %s1652 = smul.addr %s1651, 32
          %s1653 = scalar_lea.vmem [#allocation2], %s1652
          %1654 = dma.done %s1650, 512
        $region64: #{tpu_custom_call.1} parent=59 // pred_fallthru
          _
        // Predicated region
        $region65: #{tpu_custom_call.1} parent=59 // pred_check
          %p1655 = pneg %p233
        $region66: #{tpu_custom_call.1} parent=59 // pred_check_branch
          %1657 = sbr.rel (%p1655) target = $region68
        $region67: #{tpu_custom_call.1} parent=59 // pred_region
          %s1658 = sand.u32 %s218, 1
          %s1659 = scalar_lea.sflag [#allocation5], %s1658
          %s1660 = sand.u32 %s218, 1
          %s1661 = smul.addr %s1660, 32
          %s1662 = scalar_lea.vmem [#allocation4], %s1661
          %1663 = dma.done %s1659, 512
        $region68: #{tpu_custom_call.1} parent=59 // pred_fallthru
          _
      $region60: #{tpu_custom_call.1} parent=5 // pred_fallthru
        _
    $region6: #{tpu_custom_call.1} parent=1 // loop_footer
      %s25 = sadd.s32 1, %s21
    $region7: #{tpu_custom_call.1} parent=1 // loop_footer_branch
      %20 = sbr.rel target = $region3
    $region8: #{tpu_custom_call.1} parent=1 // loop_exit
      _
    %1664 = vsyncpa [#allocation3], 1
    %s1665 = scalar_lea.sflag [#allocation3], 1
    %1666 = vsyncpa %s1665, 1
    %1667 = vsyncpa [#allocation5], 1
    %s1668 = scalar_lea.sflag [#allocation5], 1
    %1669 = vsyncpa %s1668, 1

</llo_original>
